<compile_context>
chip_gen: v7x
topology: tpu7x:2x2x1
jax: 0.10.0
libtpu: 0.0.40
codegen_flags: <defaults>
</compile_context>

<pallas_src>
import math

import jax
import jax.numpy as jnp
from jax.experimental import pallas as pl
from jax.experimental.pallas import tpu as pltpu

F_HIDDEN = 128   # GraphConv hidden width (also the lane-padded feature width / node-pad granule)
BN_EPS = 1e-5    # torch.nn.BatchNorm1d default eps


def _round_up(n, m):
    return ((n + m - 1) // m) * m


def _full_spec(shape):
    # Whole-array block (no grid): block_shape == full array dims is always legal.
    return pl.BlockSpec(shape, lambda *_: (0,) * len(shape))


# ---------------------------------------------------------------------------
# Fused GCN forward kernel: 3x (GraphConv + folded-BN + ReLU) -> lin1 -> ReLU -> lin2
# ---------------------------------------------------------------------------
def _gcn_fused_kernel(x_ref, a1_ref, a2_ref, a3_ref, w_ref, b_ref, o_ref):
    f = x_ref.shape[1]                        # 128 (lane-padded feature width)
    hb = x_ref[...]                           # (N0p, 128) bf16 node features

    # --- three GraphConv layers; intermediates never leave VMEM/vregs ---
    for li, a_ref in enumerate((a1_ref, a2_ref, a3_ref)):
        nt = a_ref.shape[0]                   # padded target-node count (static, multiple of 128)
        # neighbor sum-aggregation as dense matmul: (Ntp, Nsp) @ (Nsp, 128) -> f32
        agg = jnp.dot(a_ref[...], hb, preferred_element_type=jnp.float32)
        w_rel = w_ref[2 * f * li:2 * f * li + f, :]          # (128, 128) bf16, BN-folded
        w_root = w_ref[2 * f * li + f:2 * f * (li + 1), :]   # (128, 128) bf16, BN-folded
        # split-accumulate merged linear (no lane-dim concat):
        h = (jnp.dot(agg.astype(jnp.bfloat16), w_rel, preferred_element_type=jnp.float32)
             + jnp.dot(hb[0:nt, :], w_root, preferred_element_type=jnp.float32)
             + b_ref[li:li + 1, :])
        h = jnp.maximum(h, 0.0)               # ReLU (dropout is identity in eval mode)
        hb = h.astype(jnp.bfloat16)

    # --- MLP head: lin1 -> ReLU -> lin2 (both padded to 128 output lanes => dense stores) ---
    h = jnp.dot(hb, w_ref[6 * f:7 * f, :], preferred_element_type=jnp.float32) + b_ref[3:4, :]
    h = jnp.maximum(h, 0.0)
    o_ref[...] = (jnp.dot(h.astype(jnp.bfloat16), w_ref[7 * f:8 * f, :],
                          preferred_element_type=jnp.float32) + b_ref[4:5, :])


# ---------------------------------------------------------------------------
# One-time wrapper-side parameter folding / packing (call ONCE, not per forward)
# ---------------------------------------------------------------------------
def _pad2d(a, rows, cols):
    return jnp.pad(a, ((0, rows - a.shape[0]), (0, cols - a.shape[1])))


def _fold_bn(conv, bn):
    """Fold eval-mode BatchNorm1d (and b_rel) into the GraphConv weights."""
    scale = bn["gamma"] * jax.lax.rsqrt(bn["var"] + BN_EPS)            # (1, 128)
    w_rel = conv["w_rel"] * scale
    w_root = conv["w_root"] * scale
    bias = (conv["b_rel"] - bn["mean"]) * scale + bn["beta"]
    return w_rel, w_root, bias


def _pack_params(params):
    """One (1024,128) bf16 weight slab + one (5,128) f32 bias slab for the whole network."""
    w_rows, b_rows = [], []
    for conv, bn in zip(params["convs"], params["bns"]):
        w_rel, w_root, bias = _fold_bn(conv, bn)
        w_rel = _pad2d(w_rel, F_HIDDEN, F_HIDDEN)       # Fin -> 128 (only layer 1 actually pads)
        w_root = _pad2d(w_root, F_HIDDEN, F_HIDDEN)
        w_rows.append(jnp.concatenate([w_rel, w_root], axis=0))        # (256, 128)
        b_rows.append(bias)                                            # (1, 128)
    w_rows.append(_pad2d(params["w1"], F_HIDDEN, F_HIDDEN))            # lin1 -> (128, 128)
    w_rows.append(_pad2d(params["w2"], F_HIDDEN, F_HIDDEN))            # lin2 -> (128, 128)
    b_rows.append(_pad2d(params["b1"], 1, F_HIDDEN))
    b_rows.append(_pad2d(params["b2"], 1, F_HIDDEN))
    w_pack = jnp.concatenate(w_rows, axis=0).astype(jnp.bfloat16)      # (1024, 128) bf16
    b_pack = jnp.concatenate(b_rows, axis=0)                           # (5, 128)    f32
    return w_pack, b_pack


def prepare_gcn(params, adj_mats):
    """Batch-invariant preprocessing: fold BN, pack weights, pad + bf16-cast adjacencies.

    Call once; the returned arrays are reused by every gcn_forward call.
    Zero-padding of adjacency rows/cols is inert under sum aggregation; padded output rows are
    sliced away by the caller.
    """
    w_pack, b_pack = _pack_params(params)
    a_padded = []
    ns_pad = _round_up(adj_mats[0].shape[1], F_HIDDEN)   # padded source count of layer 0
    for a in adj_mats:
        nt, ns = a.shape
        assert nt <= ns, "NeighborSampler convention: targets are a prefix of sources"
        nt_pad = _round_up(nt, F_HIDDEN)
        # edge multiplicities are small integers -> exact in bf16
        a_padded.append(_pad2d(a, nt_pad, ns_pad).astype(jnp.bfloat16))
        ns_pad = nt_pad                                  # next layer's sources = this layer's targets
    return w_pack, b_pack, tuple(a_padded)


# ---------------------------------------------------------------------------
# Jitted forward on pre-packed operands (single fused Pallas kernel)
# ---------------------------------------------------------------------------
@jax.jit
def gcn_forward_packed(x, a1, a2, a3, w_pack, b_pack):
    n0_pad = a1.shape[1]
    nt_out_pad = a3.shape[0]
    assert x.shape[0] <= n0_pad and x.shape[1] <= F_HIDDEN
    # per-batch work only: pad x to the aligned slab and cast to bf16 (MXU operand dtype)
    x_pad = _pad2d(x, n0_pad, F_HIDDEN).astype(jnp.bfloat16)

    args = (x_pad, a1, a2, a3, w_pack, b_pack)
    out_bytes = nt_out_pad * F_HIDDEN * 4
    in_bytes = sum(int(v.size) * v.dtype.itemsize for v in args)
    vmem_limit = min(100 * 1024 * 1024, max(32 * 1024 * 1024, 2 * (in_bytes + out_bytes) + (4 << 20)))

    return pl.pallas_call(
        _gcn_fused_kernel,
        out_shape=jax.ShapeDtypeStruct((nt_out_pad, F_HIDDEN), jnp.float32),
        in_specs=[_full_spec(v.shape) for v in args],
        out_specs=_full_spec((nt_out_pad, F_HIDDEN)),
        compiler_params=pltpu.CompilerParams(vmem_limit_bytes=int(vmem_limit)),
    )(*args)


def gcn_forward(x, packed, nt_out, num_classes):
    w_pack, b_pack, (a1, a2, a3) = packed
    out = gcn_forward_packed(x, a1, a2, a3, w_pack, b_pack)
    return out[:nt_out, :num_classes]


# ---------------------------------------------------------------------------
# Pure-JAX reference (f32), mirrors the PyTorch module in eval mode
# ---------------------------------------------------------------------------
def gcn_reference(x, adj_mats, params):
    h = x
    for a, conv, bn in zip(adj_mats, params["convs"], params["bns"]):
        nt = a.shape[0]
        h_tgt = h[:nt]
        z = (a @ h) @ conv["w_rel"] + conv["b_rel"] + h_tgt @ conv["w_root"]
        z = (z - bn["mean"]) * jax.lax.rsqrt(bn["var"] + BN_EPS) * bn["gamma"] + bn["beta"]
        h = jnp.maximum(z, 0.0)
    h = jnp.maximum(h @ params["w1"] + params["b1"], 0.0)
    return h @ params["w2"] + params["b2"]


# ---------------------------------------------------------------------------
# Deterministic parameter / input construction
# ---------------------------------------------------------------------------
def build_params(key, num_features, num_classes, hidden=F_HIDDEN):
    ks = list(jax.random.split(key, 16))
    dims = [(num_features, hidden), (hidden, hidden), (hidden, hidden)]
    convs, bns = [], []
    for li, (fin, fout) in enumerate(dims):
        k1, k2, k3 = jax.random.split(ks[li], 3)
        convs.append({
            # weights stored as (Fin, Fout) so the kernel does x @ W
            "w_rel": jax.random.normal(k1, (fin, fout), jnp.float32) * 0.05,
            "b_rel": jax.random.normal(k2, (1, fout), jnp.float32) * 0.05,
            "w_root": jax.random.normal(k3, (fin, fout), jnp.float32) * 0.05,
        })
        k4, k5, k6, k7 = jax.random.split(ks[4 + li], 4)
        bns.append({
            "gamma": 1.0 + 0.1 * jax.random.normal(k4, (1, fout), jnp.float32),
            "beta": 0.1 * jax.random.normal(k5, (1, fout), jnp.float32),
            "mean": 0.1 * jax.random.normal(k6, (1, fout), jnp.float32),
            "var": 1.0 + 0.1 * jax.random.uniform(k7, (1, fout), jnp.float32),
        })
    kw1, kb1, kw2, kb2 = jax.random.split(ks[10], 4)
    return {
        "convs": convs,
        "bns": bns,
        "w1": jax.random.normal(kw1, (hidden, 64), jnp.float32) * 0.05,
        "b1": jax.random.normal(kb1, (1, 64), jnp.float32) * 0.05,
        "w2": jax.random.normal(kw2, (64, num_classes), jnp.float32) * 0.05,
        "b2": jax.random.normal(kb2, (1, num_classes), jnp.float32) * 0.05,
    }


def edges_to_dense_adj(edge_index, n_src, n_tgt):
    # A[t, s] += 1 for every edge s -> t  (sum aggregation with edge multiplicity)
    src, tgt = edge_index[0], edge_index[1]
    a = jnp.zeros((n_tgt, n_src), jnp.float32)
    return a.at[tgt, src].add(1.0)


if __name__ == "__main__":
    num_features = 16
    num_classes = 8
    # NeighborSampler-style shrinking node sets: 32 -> 24 -> 16 -> 8
    layer_sizes = [(32, 24), (24, 16), (16, 8)]
    n_edges = [64, 48, 32]

    key = jax.random.PRNGKey(0)
    k_x, k_p, k_e = jax.random.split(key, 3)

    x = jax.random.normal(k_x, (layer_sizes[0][0], num_features), jnp.float32)
    params = build_params(k_p, num_features, num_classes)

    adj_mats = []
    ekeys = jax.random.split(k_e, len(layer_sizes))
    for (ns, nt), ne, ek in zip(layer_sizes, n_edges, ekeys):
        ksrc, ktgt = jax.random.split(ek)
        src = jax.random.randint(ksrc, (ne,), 0, ns)
        tgt = jax.random.randint(ktgt, (ne,), 0, nt)
        adj_mats.append(edges_to_dense_adj(jnp.stack([src, tgt], axis=0), ns, nt))

    # One-time packing (batch-invariant): BN folding, weight/bias slabs, padded bf16 adjacencies.
    packed = prepare_gcn(params, adj_mats)
    packed = jax.block_until_ready(packed)

    nt_out = adj_mats[-1].shape[0]
    out = jax.block_until_ready(gcn_forward(x, packed, nt_out, num_classes))
    ref = gcn_reference(x, adj_mats, params)

    assert out.shape == (layer_sizes[-1][1], num_classes)
    assert bool(jnp.all(jnp.isfinite(out)))
    # bf16 MXU operands with f32 accumulation -> small numeric deviation from the f32 reference
    max_err = float(jnp.max(jnp.abs(out - ref)))
    assert max_err < 3e-2, f"max abs error vs reference: {max_err}"
    print("KERNEL_OK")
</pallas_src>

<mosaic_0001>
module attributes {stable_mosaic.version = 11 : i64} {
  func.func @_gcn_fused_kernel(%arg0: memref<128x128xbf16, #tpu.memory_space<vmem>>, %arg1: memref<128x128xbf16, #tpu.memory_space<vmem>>, %arg2: memref<128x128xbf16, #tpu.memory_space<vmem>>, %arg3: memref<128x128xbf16, #tpu.memory_space<vmem>>, %arg4: memref<1024x128xbf16, #tpu.memory_space<vmem>>, %arg5: memref<5x128xf32, #tpu.memory_space<vmem>>, %arg6: memref<128x128xf32, #tpu.memory_space<vmem>>) attributes {dimension_semantics = [], scalar_prefetch = 0 : i64, scratch_operands = 0 : i64, tpu.core_type = #tpu.core_type<tc>} {
    %c0 = arith.constant 0 : index
    %c0_0 = arith.constant 0 : index
    %0 = vector.load %arg0[%c0, %c0_0] : memref<128x128xbf16, #tpu.memory_space<vmem>>, vector<128x128xbf16>
    %c0_1 = arith.constant 0 : index
    %c0_2 = arith.constant 0 : index
    %1 = vector.load %arg1[%c0_1, %c0_2] : memref<128x128xbf16, #tpu.memory_space<vmem>>, vector<128x128xbf16>
    %cst = arith.constant dense<0.000000e+00> : vector<128x128xf32>
    %2 = tpu.matmul %1, %0, %cst {dimension_numbers = #tpu.dot_dimension_numbers<[1], [0], [0], [1], [0, 0, 1, 1], [], []>} : vector<128x128xbf16>, vector<128x128xbf16>, vector<128x128xf32> -> vector<128x128xf32>
    %c0_3 = arith.constant 0 : index
    %c0_4 = arith.constant 0 : index
    %3 = vector.load %arg4[%c0_3, %c0_4] : memref<1024x128xbf16, #tpu.memory_space<vmem>>, vector<128x128xbf16>
    %c128 = arith.constant 128 : index
    %c0_5 = arith.constant 0 : index
    %4 = vector.load %arg4[%c128, %c0_5] : memref<1024x128xbf16, #tpu.memory_space<vmem>>, vector<128x128xbf16>
    %5 = arith.truncf %2 : vector<128x128xf32> to vector<128x128xbf16>
    %cst_6 = arith.constant dense<0.000000e+00> : vector<128x128xf32>
    %6 = tpu.matmul %5, %3, %cst_6 {dimension_numbers = #tpu.dot_dimension_numbers<[1], [0], [0], [1], [0, 0, 1, 1], [], []>} : vector<128x128xbf16>, vector<128x128xbf16>, vector<128x128xf32> -> vector<128x128xf32>
    %cst_7 = arith.constant dense<0.000000e+00> : vector<128x128xf32>
    %7 = tpu.matmul %0, %4, %cst_7 {dimension_numbers = #tpu.dot_dimension_numbers<[1], [0], [0], [1], [0, 0, 1, 1], [], []>} : vector<128x128xbf16>, vector<128x128xbf16>, vector<128x128xf32> -> vector<128x128xf32>
    %8 = arith.addf %6, %7 : vector<128x128xf32>
    %c0_8 = arith.constant 0 : index
    %c0_9 = arith.constant 0 : index
    %9 = vector.load %arg5[%c0_8, %c0_9] : memref<5x128xf32, #tpu.memory_space<vmem>>, vector<1x128xf32>
    %10 = vector.broadcast %9 : vector<1x128xf32> to vector<128x128xf32>
    %11 = arith.addf %8, %10 : vector<128x128xf32>
    %cst_10 = arith.constant 0.000000e+00 : f32
    %12 = vector.broadcast %cst_10 : f32 to vector<128x128xf32>
    %13 = arith.maximumf %11, %12 : vector<128x128xf32>
    %14 = arith.truncf %13 : vector<128x128xf32> to vector<128x128xbf16>
    %c0_11 = arith.constant 0 : index
    %c0_12 = arith.constant 0 : index
    %15 = vector.load %arg2[%c0_11, %c0_12] : memref<128x128xbf16, #tpu.memory_space<vmem>>, vector<128x128xbf16>
    %cst_13 = arith.constant dense<0.000000e+00> : vector<128x128xf32>
    %16 = tpu.matmul %15, %14, %cst_13 {dimension_numbers = #tpu.dot_dimension_numbers<[1], [0], [0], [1], [0, 0, 1, 1], [], []>} : vector<128x128xbf16>, vector<128x128xbf16>, vector<128x128xf32> -> vector<128x128xf32>
    %c256 = arith.constant 256 : index
    %c0_14 = arith.constant 0 : index
    %17 = vector.load %arg4[%c256, %c0_14] : memref<1024x128xbf16, #tpu.memory_space<vmem>>, vector<128x128xbf16>
    %c384 = arith.constant 384 : index
    %c0_15 = arith.constant 0 : index
    %18 = vector.load %arg4[%c384, %c0_15] : memref<1024x128xbf16, #tpu.memory_space<vmem>>, vector<128x128xbf16>
    %19 = arith.truncf %16 : vector<128x128xf32> to vector<128x128xbf16>
    %cst_16 = arith.constant dense<0.000000e+00> : vector<128x128xf32>
    %20 = tpu.matmul %19, %17, %cst_16 {dimension_numbers = #tpu.dot_dimension_numbers<[1], [0], [0], [1], [0, 0, 1, 1], [], []>} : vector<128x128xbf16>, vector<128x128xbf16>, vector<128x128xf32> -> vector<128x128xf32>
    %cst_17 = arith.constant dense<0.000000e+00> : vector<128x128xf32>
    %21 = tpu.matmul %14, %18, %cst_17 {dimension_numbers = #tpu.dot_dimension_numbers<[1], [0], [0], [1], [0, 0, 1, 1], [], []>} : vector<128x128xbf16>, vector<128x128xbf16>, vector<128x128xf32> -> vector<128x128xf32>
    %22 = arith.addf %20, %21 : vector<128x128xf32>
    %c1 = arith.constant 1 : index
    %c0_18 = arith.constant 0 : index
    %23 = vector.load %arg5[%c1, %c0_18] : memref<5x128xf32, #tpu.memory_space<vmem>>, vector<1x128xf32>
    %24 = vector.broadcast %23 : vector<1x128xf32> to vector<128x128xf32>
    %25 = arith.addf %22, %24 : vector<128x128xf32>
    %cst_19 = arith.constant 0.000000e+00 : f32
    %26 = vector.broadcast %cst_19 : f32 to vector<128x128xf32>
    %27 = arith.maximumf %25, %26 : vector<128x128xf32>
    %28 = arith.truncf %27 : vector<128x128xf32> to vector<128x128xbf16>
    %c0_20 = arith.constant 0 : index
    %c0_21 = arith.constant 0 : index
    %29 = vector.load %arg3[%c0_20, %c0_21] : memref<128x128xbf16, #tpu.memory_space<vmem>>, vector<128x128xbf16>
    %cst_22 = arith.constant dense<0.000000e+00> : vector<128x128xf32>
    %30 = tpu.matmul %29, %28, %cst_22 {dimension_numbers = #tpu.dot_dimension_numbers<[1], [0], [0], [1], [0, 0, 1, 1], [], []>} : vector<128x128xbf16>, vector<128x128xbf16>, vector<128x128xf32> -> vector<128x128xf32>
    %c512 = arith.constant 512 : index
    %c0_23 = arith.constant 0 : index
    %31 = vector.load %arg4[%c512, %c0_23] : memref<1024x128xbf16, #tpu.memory_space<vmem>>, vector<128x128xbf16>
    %c640 = arith.constant 640 : index
    %c0_24 = arith.constant 0 : index
    %32 = vector.load %arg4[%c640, %c0_24] : memref<1024x128xbf16, #tpu.memory_space<vmem>>, vector<128x128xbf16>
    %33 = arith.truncf %30 : vector<128x128xf32> to vector<128x128xbf16>
    %cst_25 = arith.constant dense<0.000000e+00> : vector<128x128xf32>
    %34 = tpu.matmul %33, %31, %cst_25 {dimension_numbers = #tpu.dot_dimension_numbers<[1], [0], [0], [1], [0, 0, 1, 1], [], []>} : vector<128x128xbf16>, vector<128x128xbf16>, vector<128x128xf32> -> vector<128x128xf32>
    %cst_26 = arith.constant dense<0.000000e+00> : vector<128x128xf32>
    %35 = tpu.matmul %28, %32, %cst_26 {dimension_numbers = #tpu.dot_dimension_numbers<[1], [0], [0], [1], [0, 0, 1, 1], [], []>} : vector<128x128xbf16>, vector<128x128xbf16>, vector<128x128xf32> -> vector<128x128xf32>
    %36 = arith.addf %34, %35 : vector<128x128xf32>
    %c2 = arith.constant 2 : index
    %c0_27 = arith.constant 0 : index
    %37 = vector.load %arg5[%c2, %c0_27] : memref<5x128xf32, #tpu.memory_space<vmem>>, vector<1x128xf32>
    %38 = vector.broadcast %37 : vector<1x128xf32> to vector<128x128xf32>
    %39 = arith.addf %36, %38 : vector<128x128xf32>
    %cst_28 = arith.constant 0.000000e+00 : f32
    %40 = vector.broadcast %cst_28 : f32 to vector<128x128xf32>
    %41 = arith.maximumf %39, %40 : vector<128x128xf32>
    %42 = arith.truncf %41 : vector<128x128xf32> to vector<128x128xbf16>
    %c768 = arith.constant 768 : index
    %c0_29 = arith.constant 0 : index
    %43 = vector.load %arg4[%c768, %c0_29] : memref<1024x128xbf16, #tpu.memory_space<vmem>>, vector<128x128xbf16>
    %cst_30 = arith.constant dense<0.000000e+00> : vector<128x128xf32>
    %44 = tpu.matmul %42, %43, %cst_30 {dimension_numbers = #tpu.dot_dimension_numbers<[1], [0], [0], [1], [0, 0, 1, 1], [], []>} : vector<128x128xbf16>, vector<128x128xbf16>, vector<128x128xf32> -> vector<128x128xf32>
    %c3 = arith.constant 3 : index
    %c0_31 = arith.constant 0 : index
    %45 = vector.load %arg5[%c3, %c0_31] : memref<5x128xf32, #tpu.memory_space<vmem>>, vector<1x128xf32>
    %46 = vector.broadcast %45 : vector<1x128xf32> to vector<128x128xf32>
    %47 = arith.addf %44, %46 : vector<128x128xf32>
    %cst_32 = arith.constant 0.000000e+00 : f32
    %48 = vector.broadcast %cst_32 : f32 to vector<128x128xf32>
    %49 = arith.maximumf %47, %48 : vector<128x128xf32>
    %50 = arith.truncf %49 : vector<128x128xf32> to vector<128x128xbf16>
    %c896 = arith.constant 896 : index
    %c0_33 = arith.constant 0 : index
    %51 = vector.load %arg4[%c896, %c0_33] : memref<1024x128xbf16, #tpu.memory_space<vmem>>, vector<128x128xbf16>
    %cst_34 = arith.constant dense<0.000000e+00> : vector<128x128xf32>
    %52 = tpu.matmul %50, %51, %cst_34 {dimension_numbers = #tpu.dot_dimension_numbers<[1], [0], [0], [1], [0, 0, 1, 1], [], []>} : vector<128x128xbf16>, vector<128x128xbf16>, vector<128x128xf32> -> vector<128x128xf32>
    %c4 = arith.constant 4 : index
    %c0_35 = arith.constant 0 : index
    %53 = vector.load %arg5[%c4, %c0_35] : memref<5x128xf32, #tpu.memory_space<vmem>>, vector<1x128xf32>
    %54 = vector.broadcast %53 : vector<1x128xf32> to vector<128x128xf32>
    %55 = arith.addf %52, %54 : vector<128x128xf32>
    %c0_36 = arith.constant 0 : index
    %c0_37 = arith.constant 0 : index
    %56 = vector.load %arg6[%c0_36, %c0_37] : memref<128x128xf32, #tpu.memory_space<vmem>>, vector<128x128xf32>
    tpu.vector_store %arg6[%c0_36, %c0_37], %55 {strides = array<i32>} : memref<128x128xf32, #tpu.memory_space<vmem>>, vector<128x128xf32>,
    return
  }
}

</mosaic_0001>

<llo_original>
// kernel: gcn_forward_packed.1
$region0: #{gcn_forward_packed.1}
  #allocation0 [shape = 'u32[]', space=smem, size = 0x4, offset = 0x4, fixed_abs, tag = 'smem constant byte address 0x4 - core index']
  #allocation1 [shape = 'u32[144,128]{1,0:T(1,128)}', space=vmem, size = 0x12000, scoped, tag = 'internal scratch']
  %s0 = inlined_call_operand.vmem [shape: bf16[128,128], index: 0, kind: input, shape index: {}]
  %s1 = inlined_call_operand.vmem [shape: bf16[128,128], index: 1, kind: input, shape index: {}]
  %s2 = inlined_call_operand.vmem [shape: bf16[128,128], index: 2, kind: input, shape index: {}]
  %s3 = inlined_call_operand.hbm [shape: bf16[128,128], index: 3, kind: input, shape index: {}]
  %s4 = inlined_call_operand.hbm [shape: bf16[1024,128], index: 4, kind: input, shape index: {}]
  %s5 = inlined_call_operand.vmem [shape: f32[5,128], index: 5, kind: input, shape index: {}]
  %s6 = inlined_call_operand.hbm [shape: f32[128,128], index: 6, kind: output, shape index: {}]
  %s7 = sld [smem:[#allocation0]]
  $region42: #{gcn_forward_packed.1} parent=0
    _
  %s9 = ssub.s32 1, %s7
  %s10 = scalar_select 0, %s9, %s7
  $region1: #{gcn_forward_packed.1} parent=0
    #allocation2 [shape = 'u8[32768]{0}', space=vmem, size = 0x8000, scoped, tag = 'input window, operand 3, single buffered']
    #allocation3 [shape = 's32[1]{0}', space=sflag, size = 0x4, scoped, tag = 'scoped memory for gcn_forward_packed.1']
    #allocation4 [shape = 's32[1]{0}', space=sflag, size = 0x4, scoped, tag = 'scoped memory for gcn_forward_packed.1']
    #allocation5 [shape = 'u8[262144]{0}', space=vmem, size = 0x40000, scoped, tag = 'input window, operand 4, single buffered']
    #allocation6 [shape = 's32[1]{0}', space=sflag, size = 0x4, scoped, tag = 'scoped memory for gcn_forward_packed.1']
    #allocation7 [shape = 'u8[65536]{0}', space=vmem, size = 0x10000, scoped, tag = 'output window, operand 0, single buffered']
    %11 = vsyncpa [#allocation3], 0
    %12 = vsyncpa [#allocation6], 0
    %13 = vsyncpa [#allocation4], 0
    // Predicated region
    $region2: #{gcn_forward_packed.1} parent=1 // pred_check
      _
    $region3: #{gcn_forward_packed.1} parent=1 // pred_check_branch
      %15 = sbr.rel (0) target = $region5
    $region4: #{gcn_forward_packed.1} parent=1 // pred_region
      _
    $region5: #{gcn_forward_packed.1} parent=1 // pred_fallthru
      _
    // Predicated region
    $region6: #{gcn_forward_packed.1} parent=1 // pred_check
      _
    $region7: #{gcn_forward_packed.1} parent=1 // pred_check_branch
      %17 = sbr.rel (0) target = $region9
    $region8: #{gcn_forward_packed.1} parent=1 // pred_region
      _
    $region9: #{gcn_forward_packed.1} parent=1 // pred_fallthru
      _
    // Predicated region
    $region10: #{gcn_forward_packed.1} parent=1 // pred_check
      _
    $region11: #{gcn_forward_packed.1} parent=1 // pred_check_branch
      %19 = sbr.rel (0) target = $region13
    $region12: #{gcn_forward_packed.1} parent=1 // pred_region
      _
    $region13: #{gcn_forward_packed.1} parent=1 // pred_fallthru
      _
    // Predicated region
    $region14: #{gcn_forward_packed.1} parent=1 // pred_check
      _
    $region15: #{gcn_forward_packed.1} parent=1 // pred_check_branch
      %21 = sbr.rel (0) target = $region17
    $region16: #{gcn_forward_packed.1} parent=1 // pred_region
      %s23 = ssub.s32 1024, 1024
      %24 = vsyncadd [#allocation3], %s23
      %s25 = sshll.u32 [#allocation2], 4
      %s26 = int_to_ptr.vmem [resolvable:$true] %s25
      %31 = dma.hbm_to_vmem [thread:$0]  %s3, 1024, %s26, [#allocation3], 64, 64, 4
    $region17: #{gcn_forward_packed.1} parent=1 // pred_fallthru
      _
    // Predicated region
    $region18: #{gcn_forward_packed.1} parent=1 // pred_check
      _
    $region19: #{gcn_forward_packed.1} parent=1 // pred_check_branch
      %33 = sbr.rel (0) target = $region21
    $region20: #{gcn_forward_packed.1} parent=1 // pred_region
      %s35 = ssub.s32 8192, 8192
      %36 = vsyncadd [#allocation6], %s35
      %s37 = sshll.u32 [#allocation5], 4
      %s38 = int_to_ptr.vmem [resolvable:$true] %s37
      %43 = dma.hbm_to_vmem [thread:$0]  %s4, 8192, %s38, [#allocation6], 64, 64, 4
    $region21: #{gcn_forward_packed.1} parent=1 // pred_fallthru
      _
    // Predicated region
    $region22: #{gcn_forward_packed.1} parent=1 // pred_check
      _
    $region23: #{gcn_forward_packed.1} parent=1 // pred_check_branch
      %45 = sbr.rel (0) target = $region25
    $region24: #{gcn_forward_packed.1} parent=1 // pred_region
      _
    $region25: #{gcn_forward_packed.1} parent=1 // pred_fallthru
      _
    // Predicated region
    $region26: #{gcn_forward_packed.1} parent=1 // pred_check
      _
    $region27: #{gcn_forward_packed.1} parent=1 // pred_check_branch
      %47 = sbr.rel (0) target = $region29
    $region28: #{gcn_forward_packed.1} parent=1 // pred_region
      %48 = dma.done [#allocation3], 1024
    $region29: #{gcn_forward_packed.1} parent=1 // pred_fallthru
      _
    // Predicated region
    $region30: #{gcn_forward_packed.1} parent=1 // pred_check
      _
    $region31: #{gcn_forward_packed.1} parent=1 // pred_check_branch
      %50 = sbr.rel (0) target = $region33
    $region32: #{gcn_forward_packed.1} parent=1 // pred_region
      %51 = dma.done [#allocation6], 8192
    $region33: #{gcn_forward_packed.1} parent=1 // pred_fallthru
      _
    %v53 = vld [vmem:[%s0] sm:$0xf]
    %v54 = vld [vmem:[%s0 + $0x4] sm:$0xf]
    %v55 = vld [vmem:[%s0 + $0x8] sm:$0xf]
    %v56 = vld [vmem:[%s0 + $0xc] sm:$0xf]
    %v57 = vld [vmem:[%s0 + $0x10] sm:$0xf]
    %v58 = vld [vmem:[%s0 + $0x14] sm:$0xf]
    %v59 = vld [vmem:[%s0 + $0x18] sm:$0xf]
    %v60 = vld [vmem:[%s0 + $0x1c] sm:$0xf]
    %v61 = vld [vmem:[%s0 + $0x20] sm:$0xf]
    %v62 = vld [vmem:[%s0 + $0x24] sm:$0xf]
    %v63 = vld [vmem:[%s0 + $0x28] sm:$0xf]
    %v64 = vld [vmem:[%s0 + $0x2c] sm:$0xf]
    %v65 = vld [vmem:[%s0 + $0x30] sm:$0xf]
    %v66 = vld [vmem:[%s0 + $0x34] sm:$0xf]
    %v67 = vld [vmem:[%s0 + $0x38] sm:$0xf]
    %v68 = vld [vmem:[%s0 + $0x3c] sm:$0xf]
    %v69 = vld [vmem:[%s1] sm:$0xf]
    %v70 = vld [vmem:[%s1 + $0x4] sm:$0xf]
    %v71 = vld [vmem:[%s1 + $0x8] sm:$0xf]
    %v72 = vld [vmem:[%s1 + $0xc] sm:$0xf]
    %v73 = vld [vmem:[%s1 + $0x10] sm:$0xf]
    %v74 = vld [vmem:[%s1 + $0x14] sm:$0xf]
    %v75 = vld [vmem:[%s1 + $0x18] sm:$0xf]
    %v76 = vld [vmem:[%s1 + $0x1c] sm:$0xf]
    %v77 = vld [vmem:[%s1 + $0x20] sm:$0xf]
    %v78 = vld [vmem:[%s1 + $0x24] sm:$0xf]
    %v79 = vld [vmem:[%s1 + $0x28] sm:$0xf]
    %v80 = vld [vmem:[%s1 + $0x2c] sm:$0xf]
    %v81 = vld [vmem:[%s1 + $0x30] sm:$0xf]
    %v82 = vld [vmem:[%s1 + $0x34] sm:$0xf]
    %v83 = vld [vmem:[%s1 + $0x38] sm:$0xf]
    %v84 = vld [vmem:[%s1 + $0x3c] sm:$0xf]
    %v101 = vunpack.c.l.b16 %v69
    %v102 = vunpack.c.l.b16 %v70
    %v103 = vunpack.c.l.b16 %v71
    %v104 = vunpack.c.l.b16 %v72
    %v105 = vunpack.c.l.b16 %v73
    %v106 = vunpack.c.l.b16 %v74
    %v107 = vunpack.c.l.b16 %v75
    %v108 = vunpack.c.l.b16 %v76
    %v109 = vunpack.c.l.b16 %v77
    %v110 = vunpack.c.l.b16 %v78
    %v111 = vunpack.c.l.b16 %v79
    %v112 = vunpack.c.l.b16 %v80
    %v113 = vunpack.c.l.b16 %v81
    %v114 = vunpack.c.l.b16 %v82
    %v115 = vunpack.c.l.b16 %v83
    %v116 = vunpack.c.l.b16 %v84
    %v117 = vpack.c.b16 %v102, %v101
    %v118 = vpack.c.b16 %v104, %v103
    %v119 = vpack.c.b16 %v106, %v105
    %v120 = vpack.c.b16 %v108, %v107
    %v121 = vpack.c.b16 %v110, %v109
    %v122 = vpack.c.b16 %v112, %v111
    %v123 = vpack.c.b16 %v114, %v113
    %v124 = vpack.c.b16 %v116, %v115
    %v149 = vunpack.c.l.b16 %v53
    %v150 = vunpack.c.l.b16 %v54
    %v151 = vunpack.c.l.b16 %v55
    %v152 = vunpack.c.l.b16 %v56
    %v153 = vunpack.c.l.b16 %v57
    %v154 = vunpack.c.l.b16 %v58
    %v155 = vunpack.c.l.b16 %v59
    %v156 = vunpack.c.l.b16 %v60
    %v157 = vunpack.c.l.b16 %v61
    %v158 = vunpack.c.l.b16 %v62
    %v159 = vunpack.c.l.b16 %v63
    %v160 = vunpack.c.l.b16 %v64
    %v161 = vunpack.c.l.b16 %v65
    %v162 = vunpack.c.l.b16 %v66
    %v163 = vunpack.c.l.b16 %v67
    %v164 = vunpack.c.l.b16 %v68
    %v165 = vpack.c.b16 %v150, %v149
    %v166 = vpack.c.b16 %v152, %v151
    %v167 = vpack.c.b16 %v154, %v153
    %v168 = vpack.c.b16 %v156, %v155
    %v169 = vpack.c.b16 %v158, %v157
    %v170 = vpack.c.b16 %v160, %v159
    %v171 = vpack.c.b16 %v162, %v161
    %v172 = vpack.c.b16 %v164, %v163
    %181 = vmatprep.subr.bf16.mxu0 0
    %182 = vmatpush1.bf16.msra.mxu0 %v165
    %183 = vmatprep.subr.bf16.mxu0 0
    %184 = vmatpush1.bf16.msra.mxu0 %v166
    %185 = vmatprep.subr.bf16.mxu0 0
    %186 = vmatpush1.bf16.msra.mxu0 %v167
    %187 = vmatprep.subr.bf16.mxu0 0
    %188 = vmatpush1.bf16.msra.mxu0 %v168
    %189 = vmatprep.subr.bf16.mxu0 0
    %190 = vmatpush1.bf16.msra.mxu0 %v169
    %191 = vmatprep.subr.bf16.mxu0 0
    %192 = vmatpush1.bf16.msra.mxu0 %v170
    %193 = vmatprep.subr.bf16.mxu0 0
    %194 = vmatpush1.bf16.msra.mxu0 %v171
    %195 = vmatprep.subr.bf16.mxu0 0
    %196 = vmatpush1.bf16.msra.mxu0 %v172
    %197 = vmatprep.subr.bf16.mxu0 0
    %198 = vmatpush1.bf16.msra.mxu0 0
    %199 = vmatprep.subr.bf16.mxu0 0
    %200 = vmatpush1.bf16.msra.mxu0 0
    %201 = vmatprep.subr.bf16.mxu0 0
    %202 = vmatpush1.bf16.msra.mxu0 0
    %203 = vmatprep.subr.bf16.mxu0 0
    %204 = vmatpush1.bf16.msra.mxu0 0
    %205 = vmatprep.subr.bf16.mxu0 0
    %206 = vmatpush1.bf16.msra.mxu0 0
    %207 = vmatprep.subr.bf16.mxu0 0
    %208 = vmatpush1.bf16.msra.mxu0 0
    %209 = vmatprep.subr.bf16.mxu0 0
    %210 = vmatpush1.bf16.msra.mxu0 0
    %211 = vmatprep.subr.bf16.mxu0 0
    %212 = vmatpush1.bf16.msra.mxu0 0
    %213 = vmatprep.mubr.bf16.mxu0 0
    %214 = vmatmul.mubr.bf16.gmra.mrb[0].mxu0 %v117
    %v215 = vpop.f32.mrb[0].mxu0
    %v216 = vadd.f32 0.0, %v215
    %v217 = vpop.f32.mrb[0].mxu0
    %v218 = vpop.f32.mrb[0].mxu0
    %v219 = vadd.f32 0.0, %v218
    %v220 = vpop.f32.mrb[0].mxu0
    %221 = vmatprep.mubr.bf16.mxu0 0
    %222 = vmatmul.mubr.bf16.gmra.mrb[0].mxu0 %v118
    %v223 = vpop.f32.mrb[0].mxu0
    %v224 = vadd.f32 0.0, %v223
    %v225 = vpop.f32.mrb[0].mxu0
    %v226 = vpop.f32.mrb[0].mxu0
    %v227 = vadd.f32 0.0, %v226
    %v228 = vpop.f32.mrb[0].mxu0
    %229 = vmatprep.mubr.bf16.mxu0 0
    %230 = vmatmul.mubr.bf16.gmra.mrb[0].mxu0 %v119
    %v231 = vpop.f32.mrb[0].mxu0
    %v232 = vadd.f32 0.0, %v231
    %v233 = vpop.f32.mrb[0].mxu0
    %v234 = vpop.f32.mrb[0].mxu0
    %v235 = vadd.f32 0.0, %v234
    %v236 = vpop.f32.mrb[0].mxu0
    %237 = vmatprep.mubr.bf16.mxu0 0
    %238 = vmatmul.mubr.bf16.gmra.mrb[0].mxu0 %v120
    %v239 = vpop.f32.mrb[0].mxu0
    %v240 = vadd.f32 0.0, %v239
    %v241 = vpop.f32.mrb[0].mxu0
    %v242 = vpop.f32.mrb[0].mxu0
    %v243 = vadd.f32 0.0, %v242
    %v244 = vpop.f32.mrb[0].mxu0
    %245 = vmatprep.mubr.bf16.mxu0 0
    %246 = vmatmul.mubr.bf16.gmra.mrb[0].mxu0 %v121
    %v247 = vpop.f32.mrb[0].mxu0
    %v248 = vadd.f32 0.0, %v247
    %v249 = vpop.f32.mrb[0].mxu0
    %v250 = vpop.f32.mrb[0].mxu0
    %v251 = vadd.f32 0.0, %v250
    %v252 = vpop.f32.mrb[0].mxu0
    %253 = vmatprep.mubr.bf16.mxu0 0
    %254 = vmatmul.mubr.bf16.gmra.mrb[0].mxu0 %v122
    %v255 = vpop.f32.mrb[0].mxu0
    %v256 = vadd.f32 0.0, %v255
    %v257 = vpop.f32.mrb[0].mxu0
    %v258 = vpop.f32.mrb[0].mxu0
    %v259 = vadd.f32 0.0, %v258
    %v260 = vpop.f32.mrb[0].mxu0
    %261 = vmatprep.mubr.bf16.mxu0 0
    %262 = vmatmul.mubr.bf16.gmra.mrb[0].mxu0 %v123
    %v263 = vpop.f32.mrb[0].mxu0
    %v264 = vadd.f32 0.0, %v263
    %v265 = vpop.f32.mrb[0].mxu0
    %v266 = vpop.f32.mrb[0].mxu0
    %v267 = vadd.f32 0.0, %v266
    %v268 = vpop.f32.mrb[0].mxu0
    %269 = vmatprep.mubr.bf16.mxu0 0
    %270 = vmatmul.mubr.bf16.gmra.mrb[0].mxu0 %v124
    %v271 = vpop.f32.mrb[0].mxu0
    %v272 = vadd.f32 0.0, %v271
    %v273 = vpop.f32.mrb[0].mxu0
    %v274 = vpop.f32.mrb[0].mxu0
    %v275 = vadd.f32 0.0, %v274
    %v276 = vpop.f32.mrb[0].mxu0
    %277 = vdwg.mxu0
    %v278 = vld [vmem:[#allocation5] sm:$0xf]
    %v279 = vld [vmem:[#allocation5 + $0x4] sm:$0xf]
    %v280 = vld [vmem:[#allocation5 + $0x8] sm:$0xf]
    %v281 = vld [vmem:[#allocation5 + $0xc] sm:$0xf]
    %v282 = vld [vmem:[#allocation5 + $0x10] sm:$0xf]
    %v283 = vld [vmem:[#allocation5 + $0x14] sm:$0xf]
    %v284 = vld [vmem:[#allocation5 + $0x18] sm:$0xf]
    %v285 = vld [vmem:[#allocation5 + $0x1c] sm:$0xf]
    %v286 = vld [vmem:[#allocation5 + $0x20] sm:$0xf]
    %v287 = vld [vmem:[#allocation5 + $0x24] sm:$0xf]
    %v288 = vld [vmem:[#allocation5 + $0x28] sm:$0xf]
    %v289 = vld [vmem:[#allocation5 + $0x2c] sm:$0xf]
    %v290 = vld [vmem:[#allocation5 + $0x30] sm:$0xf]
    %v291 = vld [vmem:[#allocation5 + $0x34] sm:$0xf]
    %v292 = vld [vmem:[#allocation5 + $0x38] sm:$0xf]
    %v293 = vld [vmem:[#allocation5 + $0x3c] sm:$0xf]
    %v294 = vld [vmem:[#allocation5 + $0x40] sm:$0xf]
    %v295 = vld [vmem:[#allocation5 + $0x44] sm:$0xf]
    %v296 = vld [vmem:[#allocation5 + $0x48] sm:$0xf]
    %v297 = vld [vmem:[#allocation5 + $0x4c] sm:$0xf]
    %v298 = vld [vmem:[#allocation5 + $0x50] sm:$0xf]
    %v299 = vld [vmem:[#allocation5 + $0x54] sm:$0xf]
    %v300 = vld [vmem:[#allocation5 + $0x58] sm:$0xf]
    %v301 = vld [vmem:[#allocation5 + $0x5c] sm:$0xf]
    %v302 = vld [vmem:[#allocation5 + $0x60] sm:$0xf]
    %v303 = vld [vmem:[#allocation5 + $0x64] sm:$0xf]
    %v304 = vld [vmem:[#allocation5 + $0x68] sm:$0xf]
    %v305 = vld [vmem:[#allocation5 + $0x6c] sm:$0xf]
    %v306 = vld [vmem:[#allocation5 + $0x70] sm:$0xf]
    %v307 = vld [vmem:[#allocation5 + $0x74] sm:$0xf]
    %v308 = vld [vmem:[#allocation5 + $0x78] sm:$0xf]
    %v309 = vld [vmem:[#allocation5 + $0x7c] sm:$0xf]
    %v310 = vpack.c.bf16 %v219, %v216
    %v311 = vpack.c.bf16 %v227, %v224
    %v312 = vpack.c.bf16 %v235, %v232
    %v313 = vpack.c.bf16 %v243, %v240
    %v314 = vpack.c.bf16 %v251, %v248
    %v315 = vpack.c.bf16 %v259, %v256
    %v316 = vpack.c.bf16 %v267, %v264
    %v317 = vpack.c.bf16 %v275, %v272
    %v334 = vunpack.c.l.b16 %v294
    %v335 = vunpack.c.l.b16 %v295
    %v336 = vunpack.c.l.b16 %v296
    %v337 = vunpack.c.l.b16 %v297
    %v338 = vunpack.c.l.b16 %v298
    %v339 = vunpack.c.l.b16 %v299
    %v340 = vunpack.c.l.b16 %v300
    %v341 = vunpack.c.l.b16 %v301
    %v342 = vunpack.c.l.b16 %v302
    %v343 = vunpack.c.l.b16 %v303
    %v344 = vunpack.c.l.b16 %v304
    %v345 = vunpack.c.l.b16 %v305
    %v346 = vunpack.c.l.b16 %v306
    %v347 = vunpack.c.l.b16 %v307
    %v348 = vunpack.c.l.b16 %v308
    %v349 = vunpack.c.l.b16 %v309
    %v350 = vpack.c.b16 %v335, %v334
    %v351 = vpack.c.b16 %v337, %v336
    %v352 = vpack.c.b16 %v339, %v338
    %v353 = vpack.c.b16 %v341, %v340
    %v354 = vpack.c.b16 %v343, %v342
    %v355 = vpack.c.b16 %v345, %v344
    %v356 = vpack.c.b16 %v347, %v346
    %v357 = vpack.c.b16 %v349, %v348
    %366 = vmatprep.subr.bf16.mxu0 0
    %367 = vmatpush1.bf16.msra.mxu0 %v350
    %368 = vmatprep.subr.bf16.mxu0 0
    %369 = vmatpush1.bf16.msra.mxu0 %v351
    %370 = vmatprep.subr.bf16.mxu0 0
    %371 = vmatpush1.bf16.msra.mxu0 %v352
    %372 = vmatprep.subr.bf16.mxu0 0
    %373 = vmatpush1.bf16.msra.mxu0 %v353
    %374 = vmatprep.subr.bf16.mxu0 0
    %375 = vmatpush1.bf16.msra.mxu0 %v354
    %376 = vmatprep.subr.bf16.mxu0 0
    %377 = vmatpush1.bf16.msra.mxu0 %v355
    %378 = vmatprep.subr.bf16.mxu0 0
    %379 = vmatpush1.bf16.msra.mxu0 %v356
    %380 = vmatprep.subr.bf16.mxu0 0
    %381 = vmatpush1.bf16.msra.mxu0 %v357
    %382 = vmatprep.subr.bf16.mxu0 0
    %383 = vmatpush1.bf16.msra.mxu0 0
    %384 = vmatprep.subr.bf16.mxu0 0
    %385 = vmatpush1.bf16.msra.mxu0 0
    %386 = vmatprep.subr.bf16.mxu0 0
    %387 = vmatpush1.bf16.msra.mxu0 0
    %388 = vmatprep.subr.bf16.mxu0 0
    %389 = vmatpush1.bf16.msra.mxu0 0
    %390 = vmatprep.subr.bf16.mxu0 0
    %391 = vmatpush1.bf16.msra.mxu0 0
    %392 = vmatprep.subr.bf16.mxu0 0
    %393 = vmatpush1.bf16.msra.mxu0 0
    %394 = vmatprep.subr.bf16.mxu0 0
    %395 = vmatpush1.bf16.msra.mxu0 0
    %396 = vmatprep.subr.bf16.mxu0 0
    %397 = vmatpush1.bf16.msra.mxu0 0
    %398 = vmatprep.mubr.bf16.mxu0 0
    %399 = vmatmul.mubr.bf16.gmra.mrb[0].mxu0 %v165
    %v400 = vpop.f32.mrb[0].mxu0
    %v401 = vadd.f32 0.0, %v400
    %v402 = vpop.f32.mrb[0].mxu0
    %v403 = vpop.f32.mrb[0].mxu0
    %v404 = vadd.f32 0.0, %v403
    %v405 = vpop.f32.mrb[0].mxu0
    %406 = vmatprep.mubr.bf16.mxu0 0
    %407 = vmatmul.mubr.bf16.gmra.mrb[0].mxu0 %v166
    %v408 = vpop.f32.mrb[0].mxu0
    %v409 = vadd.f32 0.0, %v408
    %v410 = vpop.f32.mrb[0].mxu0
    %v411 = vpop.f32.mrb[0].mxu0
    %v412 = vadd.f32 0.0, %v411
    %v413 = vpop.f32.mrb[0].mxu0
    %414 = vmatprep.mubr.bf16.mxu0 0
    %415 = vmatmul.mubr.bf16.gmra.mrb[0].mxu0 %v167
    %v416 = vpop.f32.mrb[0].mxu0
    %v417 = vadd.f32 0.0, %v416
    %v418 = vpop.f32.mrb[0].mxu0
    %v419 = vpop.f32.mrb[0].mxu0
    %v420 = vadd.f32 0.0, %v419
    %v421 = vpop.f32.mrb[0].mxu0
    %422 = vmatprep.mubr.bf16.mxu0 0
    %423 = vmatmul.mubr.bf16.gmra.mrb[0].mxu0 %v168
    %v424 = vpop.f32.mrb[0].mxu0
    %v425 = vadd.f32 0.0, %v424
    %v426 = vpop.f32.mrb[0].mxu0
    %v427 = vpop.f32.mrb[0].mxu0
    %v428 = vadd.f32 0.0, %v427
    %v429 = vpop.f32.mrb[0].mxu0
    %430 = vmatprep.mubr.bf16.mxu0 0
    %431 = vmatmul.mubr.bf16.gmra.mrb[0].mxu0 %v169
    %v432 = vpop.f32.mrb[0].mxu0
    %v433 = vadd.f32 0.0, %v432
    %v434 = vpop.f32.mrb[0].mxu0
    %v435 = vpop.f32.mrb[0].mxu0
    %v436 = vadd.f32 0.0, %v435
    %v437 = vpop.f32.mrb[0].mxu0
    %438 = vmatprep.mubr.bf16.mxu0 0
    %439 = vmatmul.mubr.bf16.gmra.mrb[0].mxu0 %v170
    %v440 = vpop.f32.mrb[0].mxu0
    %v441 = vadd.f32 0.0, %v440
    %v442 = vpop.f32.mrb[0].mxu0
    %v443 = vpop.f32.mrb[0].mxu0
    %v444 = vadd.f32 0.0, %v443
    %v445 = vpop.f32.mrb[0].mxu0
    %446 = vmatprep.mubr.bf16.mxu0 0
    %447 = vmatmul.mubr.bf16.gmra.mrb[0].mxu0 %v171
    %v448 = vpop.f32.mrb[0].mxu0
    %v449 = vadd.f32 0.0, %v448
    %v450 = vpop.f32.mrb[0].mxu0
    %v451 = vpop.f32.mrb[0].mxu0
    %v452 = vadd.f32 0.0, %v451
    %v453 = vpop.f32.mrb[0].mxu0
    %454 = vmatprep.mubr.bf16.mxu0 0
    %455 = vmatmul.mubr.bf16.gmra.mrb[0].mxu0 %v172
    %v456 = vpop.f32.mrb[0].mxu0
    %v457 = vadd.f32 0.0, %v456
    %v458 = vpop.f32.mrb[0].mxu0
    %v459 = vpop.f32.mrb[0].mxu0
    %v460 = vadd.f32 0.0, %v459
    %v461 = vpop.f32.mrb[0].mxu0
    %462 = vdwg.mxu0
    %v479 = vunpack.c.l.b16 %v278
    %v480 = vunpack.c.l.b16 %v279
    %v481 = vunpack.c.l.b16 %v280
    %v482 = vunpack.c.l.b16 %v281
    %v483 = vunpack.c.l.b16 %v282
    %v484 = vunpack.c.l.b16 %v283
    %v485 = vunpack.c.l.b16 %v284
    %v486 = vunpack.c.l.b16 %v285
    %v487 = vunpack.c.l.b16 %v286
    %v488 = vunpack.c.l.b16 %v287
    %v489 = vunpack.c.l.b16 %v288
    %v490 = vunpack.c.l.b16 %v289
    %v491 = vunpack.c.l.b16 %v290
    %v492 = vunpack.c.l.b16 %v291
    %v493 = vunpack.c.l.b16 %v292
    %v494 = vunpack.c.l.b16 %v293
    %v495 = vpack.c.b16 %v480, %v479
    %v496 = vpack.c.b16 %v482, %v481
    %v497 = vpack.c.b16 %v484, %v483
    %v498 = vpack.c.b16 %v486, %v485
    %v499 = vpack.c.b16 %v488, %v487
    %v500 = vpack.c.b16 %v490, %v489
    %v501 = vpack.c.b16 %v492, %v491
    %v502 = vpack.c.b16 %v494, %v493
    %511 = vmatprep.subr.bf16.mxu0 0
    %512 = vmatpush1.bf16.msra.mxu0 %v495
    %513 = vmatprep.subr.bf16.mxu0 0
    %514 = vmatpush1.bf16.msra.mxu0 %v496
    %515 = vmatprep.subr.bf16.mxu0 0
    %516 = vmatpush1.bf16.msra.mxu0 %v497
    %517 = vmatprep.subr.bf16.mxu0 0
    %518 = vmatpush1.bf16.msra.mxu0 %v498
    %519 = vmatprep.subr.bf16.mxu0 0
    %520 = vmatpush1.bf16.msra.mxu0 %v499
    %521 = vmatprep.subr.bf16.mxu0 0
    %522 = vmatpush1.bf16.msra.mxu0 %v500
    %523 = vmatprep.subr.bf16.mxu0 0
    %524 = vmatpush1.bf16.msra.mxu0 %v501
    %525 = vmatprep.subr.bf16.mxu0 0
    %526 = vmatpush1.bf16.msra.mxu0 %v502
    %527 = vmatprep.subr.bf16.mxu0 0
    %528 = vmatpush1.bf16.msra.mxu0 0
    %529 = vmatprep.subr.bf16.mxu0 0
    %530 = vmatpush1.bf16.msra.mxu0 0
    %531 = vmatprep.subr.bf16.mxu0 0
    %532 = vmatpush1.bf16.msra.mxu0 0
    %533 = vmatprep.subr.bf16.mxu0 0
    %534 = vmatpush1.bf16.msra.mxu0 0
    %535 = vmatprep.subr.bf16.mxu0 0
    %536 = vmatpush1.bf16.msra.mxu0 0
    %537 = vmatprep.subr.bf16.mxu0 0
    %538 = vmatpush1.bf16.msra.mxu0 0
    %539 = vmatprep.subr.bf16.mxu0 0
    %540 = vmatpush1.bf16.msra.mxu0 0
    %541 = vmatprep.subr.bf16.mxu0 0
    %542 = vmatpush1.bf16.msra.mxu0 0
    %543 = vmatprep.mubr.bf16.mxu0 0
    %544 = vmatmul.mubr.bf16.gmra.mrb[0].mxu0 %v310
    %v545 = vpop.f32.mrb[0].mxu0
    %v546 = vadd.f32 %v401, %v545
    %v547 = vpop.f32.mrb[0].mxu0
    %v548 = vpop.f32.mrb[0].mxu0
    %v549 = vadd.f32 %v404, %v548
    %v550 = vpop.f32.mrb[0].mxu0
    %551 = vmatprep.mubr.bf16.mxu0 0
    %552 = vmatmul.mubr.bf16.gmra.mrb[0].mxu0 %v311
    %v553 = vpop.f32.mrb[0].mxu0
    %v554 = vadd.f32 %v409, %v553
    %v555 = vpop.f32.mrb[0].mxu0
    %v556 = vpop.f32.mrb[0].mxu0
    %v557 = vadd.f32 %v412, %v556
    %v558 = vpop.f32.mrb[0].mxu0
    %559 = vmatprep.mubr.bf16.mxu0 0
    %560 = vmatmul.mubr.bf16.gmra.mrb[0].mxu0 %v312
    %v561 = vpop.f32.mrb[0].mxu0
    %v562 = vadd.f32 %v417, %v561
    %v563 = vpop.f32.mrb[0].mxu0
    %v564 = vpop.f32.mrb[0].mxu0
    %v565 = vadd.f32 %v420, %v564
    %v566 = vpop.f32.mrb[0].mxu0
    %567 = vmatprep.mubr.bf16.mxu0 0
    %568 = vmatmul.mubr.bf16.gmra.mrb[0].mxu0 %v313
    %v569 = vpop.f32.mrb[0].mxu0
    %v570 = vadd.f32 %v425, %v569
    %v571 = vpop.f32.mrb[0].mxu0
    %v572 = vpop.f32.mrb[0].mxu0
    %v573 = vadd.f32 %v428, %v572
    %v574 = vpop.f32.mrb[0].mxu0
    %575 = vmatprep.mubr.bf16.mxu0 0
    %576 = vmatmul.mubr.bf16.gmra.mrb[0].mxu0 %v314
    %v577 = vpop.f32.mrb[0].mxu0
    %v578 = vadd.f32 %v433, %v577
    %v579 = vpop.f32.mrb[0].mxu0
    %v580 = vpop.f32.mrb[0].mxu0
    %v581 = vadd.f32 %v436, %v580
    %v582 = vpop.f32.mrb[0].mxu0
    %583 = vmatprep.mubr.bf16.mxu0 0
    %584 = vmatmul.mubr.bf16.gmra.mrb[0].mxu0 %v315
    %v585 = vpop.f32.mrb[0].mxu0
    %v586 = vadd.f32 %v441, %v585
    %v587 = vpop.f32.mrb[0].mxu0
    %v588 = vpop.f32.mrb[0].mxu0
    %v589 = vadd.f32 %v444, %v588
    %v590 = vpop.f32.mrb[0].mxu0
    %591 = vmatprep.mubr.bf16.mxu0 0
    %592 = vmatmul.mubr.bf16.gmra.mrb[0].mxu0 %v316
    %v593 = vpop.f32.mrb[0].mxu0
    %v594 = vadd.f32 %v449, %v593
    %v595 = vpop.f32.mrb[0].mxu0
    %v596 = vpop.f32.mrb[0].mxu0
    %v597 = vadd.f32 %v452, %v596
    %v598 = vpop.f32.mrb[0].mxu0
    %599 = vmatprep.mubr.bf16.mxu0 0
    %600 = vmatmul.mubr.bf16.gmra.mrb[0].mxu0 %v317
    %v601 = vpop.f32.mrb[0].mxu0
    %v602 = vadd.f32 %v457, %v601
    %v603 = vpop.f32.mrb[0].mxu0
    %v604 = vpop.f32.mrb[0].mxu0
    %v605 = vadd.f32 %v460, %v604
    %v606 = vpop.f32.mrb[0].mxu0
    %607 = vdwg.mxu0
    %v608 = vld [vmem:[%s5] sm:$0x1]
    %v609 = vlaneseq
    %v610 = vshrl.u32 %v609, 7
    %v611 = vsub.s32 0, %v610
    %v612 = vrot.slane %v608, %v611
    %v613 = vadd.f32 %v546, %v612
    %v614 = vadd.f32 %v549, %v612
    %v615 = vadd.f32 %v554, %v612
    %v616 = vadd.f32 %v557, %v612
    %v617 = vadd.f32 %v562, %v612
    %v618 = vadd.f32 %v565, %v612
    %v619 = vadd.f32 %v570, %v612
    %v620 = vadd.f32 %v573, %v612
    %v621 = vadd.f32 %v578, %v612
    %v622 = vadd.f32 %v581, %v612
    %v623 = vadd.f32 %v586, %v612
    %v624 = vadd.f32 %v589, %v612
    %v625 = vadd.f32 %v594, %v612
    %v626 = vadd.f32 %v597, %v612
    %v627 = vadd.f32 %v602, %v612
    %v628 = vadd.f32 %v605, %v612
    %v629 = vmax.f32 %v613, 0.0
    %v630 = vmax.f32 %v614, 0.0
    %v631 = vmax.f32 %v615, 0.0
    %v632 = vmax.f32 %v616, 0.0
    %v633 = vmax.f32 %v617, 0.0
    %v634 = vmax.f32 %v618, 0.0
    %v635 = vmax.f32 %v619, 0.0
    %v636 = vmax.f32 %v620, 0.0
    %v637 = vmax.f32 %v621, 0.0
    %v638 = vmax.f32 %v622, 0.0
    %v639 = vmax.f32 %v623, 0.0
    %v640 = vmax.f32 %v624, 0.0
    %v641 = vmax.f32 %v625, 0.0
    %v642 = vmax.f32 %v626, 0.0
    %v643 = vmax.f32 %v627, 0.0
    %v644 = vmax.f32 %v628, 0.0
    %v645 = vpack.c.bf16 %v630, %v629
    %v646 = vpack.c.bf16 %v632, %v631
    %v647 = vpack.c.bf16 %v634, %v633
    %v648 = vpack.c.bf16 %v636, %v635
    %v649 = vpack.c.bf16 %v638, %v637
    %v650 = vpack.c.bf16 %v640, %v639
    %v651 = vpack.c.bf16 %v642, %v641
    %v652 = vpack.c.bf16 %v644, %v643
    %v653 = vld [vmem:[%s2] sm:$0xf]
    %v654 = vld [vmem:[%s2 + $0x4] sm:$0xf]
    %v655 = vld [vmem:[%s2 + $0x8] sm:$0xf]
    %v656 = vld [vmem:[%s2 + $0xc] sm:$0xf]
    %v657 = vld [vmem:[%s2 + $0x10] sm:$0xf]
    %v658 = vld [vmem:[%s2 + $0x14] sm:$0xf]
    %v659 = vld [vmem:[%s2 + $0x18] sm:$0xf]
    %v660 = vld [vmem:[%s2 + $0x1c] sm:$0xf]
    %v661 = vld [vmem:[%s2 + $0x20] sm:$0xf]
    %v662 = vld [vmem:[%s2 + $0x24] sm:$0xf]
    %v663 = vld [vmem:[%s2 + $0x28] sm:$0xf]
    %v664 = vld [vmem:[%s2 + $0x2c] sm:$0xf]
    %v665 = vld [vmem:[%s2 + $0x30] sm:$0xf]
    %v666 = vld [vmem:[%s2 + $0x34] sm:$0xf]
    %v667 = vld [vmem:[%s2 + $0x38] sm:$0xf]
    %v668 = vld [vmem:[%s2 + $0x3c] sm:$0xf]
    %v685 = vunpack.c.l.b16 %v653
    %v686 = vunpack.c.l.b16 %v654
    %v687 = vunpack.c.l.b16 %v655
    %v688 = vunpack.c.l.b16 %v656
    %v689 = vunpack.c.l.b16 %v657
    %v690 = vunpack.c.l.b16 %v658
    %v691 = vunpack.c.l.b16 %v659
    %v692 = vunpack.c.l.b16 %v660
    %v693 = vunpack.c.l.b16 %v661
    %v694 = vunpack.c.l.b16 %v662
    %v695 = vunpack.c.l.b16 %v663
    %v696 = vunpack.c.l.b16 %v664
    %v697 = vunpack.c.l.b16 %v665
    %v698 = vunpack.c.l.b16 %v666
    %v699 = vunpack.c.l.b16 %v667
    %v700 = vunpack.c.l.b16 %v668
    %v701 = vpack.c.b16 %v686, %v685
    %v702 = vpack.c.b16 %v688, %v687
    %v703 = vpack.c.b16 %v690, %v689
    %v704 = vpack.c.b16 %v692, %v691
    %v705 = vpack.c.b16 %v694, %v693
    %v706 = vpack.c.b16 %v696, %v695
    %v707 = vpack.c.b16 %v698, %v697
    %v708 = vpack.c.b16 %v700, %v699
    %717 = vmatprep.subr.bf16.mxu0 0
    %718 = vmatpush1.bf16.msra.mxu0 %v645
    %719 = vmatprep.subr.bf16.mxu0 0
    %720 = vmatpush1.bf16.msra.mxu0 %v646
    %721 = vmatprep.subr.bf16.mxu0 0
    %722 = vmatpush1.bf16.msra.mxu0 %v647
    %723 = vmatprep.subr.bf16.mxu0 0
    %724 = vmatpush1.bf16.msra.mxu0 %v648
    %725 = vmatprep.subr.bf16.mxu0 0
    %726 = vmatpush1.bf16.msra.mxu0 %v649
    %727 = vmatprep.subr.bf16.mxu0 0
    %728 = vmatpush1.bf16.msra.mxu0 %v650
    %729 = vmatprep.subr.bf16.mxu0 0
    %730 = vmatpush1.bf16.msra.mxu0 %v651
    %731 = vmatprep.subr.bf16.mxu0 0
    %732 = vmatpush1.bf16.msra.mxu0 %v652
    %733 = vmatprep.subr.bf16.mxu0 0
    %734 = vmatpush1.bf16.msra.mxu0 0
    %735 = vmatprep.subr.bf16.mxu0 0
    %736 = vmatpush1.bf16.msra.mxu0 0
    %737 = vmatprep.subr.bf16.mxu0 0
    %738 = vmatpush1.bf16.msra.mxu0 0
    %739 = vmatprep.subr.bf16.mxu0 0
    %740 = vmatpush1.bf16.msra.mxu0 0
    %741 = vmatprep.subr.bf16.mxu0 0
    %742 = vmatpush1.bf16.msra.mxu0 0
    %743 = vmatprep.subr.bf16.mxu0 0
    %744 = vmatpush1.bf16.msra.mxu0 0
    %745 = vmatprep.subr.bf16.mxu0 0
    %746 = vmatpush1.bf16.msra.mxu0 0
    %747 = vmatprep.subr.bf16.mxu0 0
    %748 = vmatpush1.bf16.msra.mxu0 0
    %749 = vmatprep.mubr.bf16.mxu0 0
    %750 = vmatmul.mubr.bf16.gmra.mrb[0].mxu0 %v701
    %v751 = vpop.f32.mrb[0].mxu0
    %v752 = vadd.f32 0.0, %v751
    %v753 = vpop.f32.mrb[0].mxu0
    %v754 = vpop.f32.mrb[0].mxu0
    %v755 = vadd.f32 0.0, %v754
    %v756 = vpop.f32.mrb[0].mxu0
    %757 = vmatprep.mubr.bf16.mxu0 0
    %758 = vmatmul.mubr.bf16.gmra.mrb[0].mxu0 %v702
    %v759 = vpop.f32.mrb[0].mxu0
    %v760 = vadd.f32 0.0, %v759
    %v761 = vpop.f32.mrb[0].mxu0
    %v762 = vpop.f32.mrb[0].mxu0
    %v763 = vadd.f32 0.0, %v762
    %v764 = vpop.f32.mrb[0].mxu0
    %765 = vmatprep.mubr.bf16.mxu0 0
    %766 = vmatmul.mubr.bf16.gmra.mrb[0].mxu0 %v703
    %v767 = vpop.f32.mrb[0].mxu0
    %v768 = vadd.f32 0.0, %v767
    %v769 = vpop.f32.mrb[0].mxu0
    %v770 = vpop.f32.mrb[0].mxu0
    %v771 = vadd.f32 0.0, %v770
    %v772 = vpop.f32.mrb[0].mxu0
    %773 = vmatprep.mubr.bf16.mxu0 0
    %774 = vmatmul.mubr.bf16.gmra.mrb[0].mxu0 %v704
    %v775 = vpop.f32.mrb[0].mxu0
    %v776 = vadd.f32 0.0, %v775
    %v777 = vpop.f32.mrb[0].mxu0
    %v778 = vpop.f32.mrb[0].mxu0
    %v779 = vadd.f32 0.0, %v778
    %v780 = vpop.f32.mrb[0].mxu0
    %781 = vmatprep.mubr.bf16.mxu0 0
    %782 = vmatmul.mubr.bf16.gmra.mrb[0].mxu0 %v705
    %v783 = vpop.f32.mrb[0].mxu0
    %v784 = vadd.f32 0.0, %v783
    %v785 = vpop.f32.mrb[0].mxu0
    %v786 = vpop.f32.mrb[0].mxu0
    %v787 = vadd.f32 0.0, %v786
    %v788 = vpop.f32.mrb[0].mxu0
    %789 = vmatprep.mubr.bf16.mxu0 0
    %790 = vmatmul.mubr.bf16.gmra.mrb[0].mxu0 %v706
    %v791 = vpop.f32.mrb[0].mxu0
    %v792 = vadd.f32 0.0, %v791
    %v793 = vpop.f32.mrb[0].mxu0
    %v794 = vpop.f32.mrb[0].mxu0
    %v795 = vadd.f32 0.0, %v794
    %v796 = vpop.f32.mrb[0].mxu0
    %797 = vmatprep.mubr.bf16.mxu0 0
    %798 = vmatmul.mubr.bf16.gmra.mrb[0].mxu0 %v707
    %v799 = vpop.f32.mrb[0].mxu0
    %v800 = vadd.f32 0.0, %v799
    %v801 = vpop.f32.mrb[0].mxu0
    %v802 = vpop.f32.mrb[0].mxu0
    %v803 = vadd.f32 0.0, %v802
    %v804 = vpop.f32.mrb[0].mxu0
    %805 = vmatprep.mubr.bf16.mxu0 0
    %806 = vmatmul.mubr.bf16.gmra.mrb[0].mxu0 %v708
    %v807 = vpop.f32.mrb[0].mxu0
    %v808 = vadd.f32 0.0, %v807
    %v809 = vpop.f32.mrb[0].mxu0
    %v810 = vpop.f32.mrb[0].mxu0
    %v811 = vadd.f32 0.0, %v810
    %v812 = vpop.f32.mrb[0].mxu0
    %813 = vdwg.mxu0
    %v814 = vld [vmem:[#allocation5 + $0x80] sm:$0xf]
    %v815 = vld [vmem:[#allocation5 + $0x84] sm:$0xf]
    %v816 = vld [vmem:[#allocation5 + $0x88] sm:$0xf]
    %v817 = vld [vmem:[#allocation5 + $0x8c] sm:$0xf]
    %v818 = vld [vmem:[#allocation5 + $0x90] sm:$0xf]
    %v819 = vld [vmem:[#allocation5 + $0x94] sm:$0xf]
    %v820 = vld [vmem:[#allocation5 + $0x98] sm:$0xf]
    %v821 = vld [vmem:[#allocation5 + $0x9c] sm:$0xf]
    %v822 = vld [vmem:[#allocation5 + $0xa0] sm:$0xf]
    %v823 = vld [vmem:[#allocation5 + $0xa4] sm:$0xf]
    %v824 = vld [vmem:[#allocation5 + $0xa8] sm:$0xf]
    %v825 = vld [vmem:[#allocation5 + $0xac] sm:$0xf]
    %v826 = vld [vmem:[#allocation5 + $0xb0] sm:$0xf]
    %v827 = vld [vmem:[#allocation5 + $0xb4] sm:$0xf]
    %v828 = vld [vmem:[#allocation5 + $0xb8] sm:$0xf]
    %v829 = vld [vmem:[#allocation5 + $0xbc] sm:$0xf]
    %v830 = vld [vmem:[#allocation5 + $0xc0] sm:$0xf]
    %v831 = vld [vmem:[#allocation5 + $0xc4] sm:$0xf]
    %v832 = vld [vmem:[#allocation5 + $0xc8] sm:$0xf]
    %v833 = vld [vmem:[#allocation5 + $0xcc] sm:$0xf]
    %v834 = vld [vmem:[#allocation5 + $0xd0] sm:$0xf]
    %v835 = vld [vmem:[#allocation5 + $0xd4] sm:$0xf]
    %v836 = vld [vmem:[#allocation5 + $0xd8] sm:$0xf]
    %v837 = vld [vmem:[#allocation5 + $0xdc] sm:$0xf]
    %v838 = vld [vmem:[#allocation5 + $0xe0] sm:$0xf]
    %v839 = vld [vmem:[#allocation5 + $0xe4] sm:$0xf]
    %v840 = vld [vmem:[#allocation5 + $0xe8] sm:$0xf]
    %v841 = vld [vmem:[#allocation5 + $0xec] sm:$0xf]
    %v842 = vld [vmem:[#allocation5 + $0xf0] sm:$0xf]
    %v843 = vld [vmem:[#allocation5 + $0xf4] sm:$0xf]
    %v844 = vld [vmem:[#allocation5 + $0xf8] sm:$0xf]
    %v845 = vld [vmem:[#allocation5 + $0xfc] sm:$0xf]
    %v846 = vpack.c.bf16 %v755, %v752
    %v847 = vpack.c.bf16 %v763, %v760
    %v848 = vpack.c.bf16 %v771, %v768
    %v849 = vpack.c.bf16 %v779, %v776
    %v850 = vpack.c.bf16 %v787, %v784
    %v851 = vpack.c.bf16 %v795, %v792
    %v852 = vpack.c.bf16 %v803, %v800
    %v853 = vpack.c.bf16 %v811, %v808
    %v870 = vunpack.c.l.b16 %v830
    %v871 = vunpack.c.l.b16 %v831
    %v872 = vunpack.c.l.b16 %v832
    %v873 = vunpack.c.l.b16 %v833
    %v874 = vunpack.c.l.b16 %v834
    %v875 = vunpack.c.l.b16 %v835
    %v876 = vunpack.c.l.b16 %v836
    %v877 = vunpack.c.l.b16 %v837
    %v878 = vunpack.c.l.b16 %v838
    %v879 = vunpack.c.l.b16 %v839
    %v880 = vunpack.c.l.b16 %v840
    %v881 = vunpack.c.l.b16 %v841
    %v882 = vunpack.c.l.b16 %v842
    %v883 = vunpack.c.l.b16 %v843
    %v884 = vunpack.c.l.b16 %v844
    %v885 = vunpack.c.l.b16 %v845
    %v886 = vpack.c.b16 %v871, %v870
    %v887 = vpack.c.b16 %v873, %v872
    %v888 = vpack.c.b16 %v875, %v874
    %v889 = vpack.c.b16 %v877, %v876
    %v890 = vpack.c.b16 %v879, %v878
    %v891 = vpack.c.b16 %v881, %v880
    %v892 = vpack.c.b16 %v883, %v882
    %v893 = vpack.c.b16 %v885, %v884
    %902 = vmatprep.subr.bf16.mxu0 0
    %903 = vmatpush1.bf16.msra.mxu0 %v886
    %904 = vmatprep.subr.bf16.mxu0 0
    %905 = vmatpush1.bf16.msra.mxu0 %v887
    %906 = vmatprep.subr.bf16.mxu0 0
    %907 = vmatpush1.bf16.msra.mxu0 %v888
    %908 = vmatprep.subr.bf16.mxu0 0
    %909 = vmatpush1.bf16.msra.mxu0 %v889
    %910 = vmatprep.subr.bf16.mxu0 0
    %911 = vmatpush1.bf16.msra.mxu0 %v890
    %912 = vmatprep.subr.bf16.mxu0 0
    %913 = vmatpush1.bf16.msra.mxu0 %v891
    %914 = vmatprep.subr.bf16.mxu0 0
    %915 = vmatpush1.bf16.msra.mxu0 %v892
    %916 = vmatprep.subr.bf16.mxu0 0
    %917 = vmatpush1.bf16.msra.mxu0 %v893
    %918 = vmatprep.subr.bf16.mxu0 0
    %919 = vmatpush1.bf16.msra.mxu0 0
    %920 = vmatprep.subr.bf16.mxu0 0
    %921 = vmatpush1.bf16.msra.mxu0 0
    %922 = vmatprep.subr.bf16.mxu0 0
    %923 = vmatpush1.bf16.msra.mxu0 0
    %924 = vmatprep.subr.bf16.mxu0 0
    %925 = vmatpush1.bf16.msra.mxu0 0
    %926 = vmatprep.subr.bf16.mxu0 0
    %927 = vmatpush1.bf16.msra.mxu0 0
    %928 = vmatprep.subr.bf16.mxu0 0
    %929 = vmatpush1.bf16.msra.mxu0 0
    %930 = vmatprep.subr.bf16.mxu0 0
    %931 = vmatpush1.bf16.msra.mxu0 0
    %932 = vmatprep.subr.bf16.mxu0 0
    %933 = vmatpush1.bf16.msra.mxu0 0
    %934 = vmatprep.mubr.bf16.mxu0 0
    %935 = vmatmul.mubr.bf16.gmra.mrb[0].mxu0 %v645
    %v936 = vpop.f32.mrb[0].mxu0
    %v937 = vadd.f32 0.0, %v936
    %v938 = vpop.f32.mrb[0].mxu0
    %v939 = vpop.f32.mrb[0].mxu0
    %v940 = vadd.f32 0.0, %v939
    %v941 = vpop.f32.mrb[0].mxu0
    %942 = vmatprep.mubr.bf16.mxu0 0
    %943 = vmatmul.mubr.bf16.gmra.mrb[0].mxu0 %v646
    %v944 = vpop.f32.mrb[0].mxu0
    %v945 = vadd.f32 0.0, %v944
    %v946 = vpop.f32.mrb[0].mxu0
    %v947 = vpop.f32.mrb[0].mxu0
    %v948 = vadd.f32 0.0, %v947
    %v949 = vpop.f32.mrb[0].mxu0
    %950 = vmatprep.mubr.bf16.mxu0 0
    %951 = vmatmul.mubr.bf16.gmra.mrb[0].mxu0 %v647
    %v952 = vpop.f32.mrb[0].mxu0
    %v953 = vadd.f32 0.0, %v952
    %v954 = vpop.f32.mrb[0].mxu0
    %v955 = vpop.f32.mrb[0].mxu0
    %v956 = vadd.f32 0.0, %v955
    %v957 = vpop.f32.mrb[0].mxu0
    %958 = vmatprep.mubr.bf16.mxu0 0
    %959 = vmatmul.mubr.bf16.gmra.mrb[0].mxu0 %v648
    %v960 = vpop.f32.mrb[0].mxu0
    %v961 = vadd.f32 0.0, %v960
    %v962 = vpop.f32.mrb[0].mxu0
    %v963 = vpop.f32.mrb[0].mxu0
    %v964 = vadd.f32 0.0, %v963
    %v965 = vpop.f32.mrb[0].mxu0
    %966 = vmatprep.mubr.bf16.mxu0 0
    %967 = vmatmul.mubr.bf16.gmra.mrb[0].mxu0 %v649
    %v968 = vpop.f32.mrb[0].mxu0
    %v969 = vadd.f32 0.0, %v968
    %v970 = vpop.f32.mrb[0].mxu0
    %v971 = vpop.f32.mrb[0].mxu0
    %v972 = vadd.f32 0.0, %v971
    %v973 = vpop.f32.mrb[0].mxu0
    %974 = vmatprep.mubr.bf16.mxu0 0
    %975 = vmatmul.mubr.bf16.gmra.mrb[0].mxu0 %v650
    %v976 = vpop.f32.mrb[0].mxu0
    %v977 = vadd.f32 0.0, %v976
    %v978 = vpop.f32.mrb[0].mxu0
    %v979 = vpop.f32.mrb[0].mxu0
    %v980 = vadd.f32 0.0, %v979
    %v981 = vpop.f32.mrb[0].mxu0
    %982 = vmatprep.mubr.bf16.mxu0 0
    %983 = vmatmul.mubr.bf16.gmra.mrb[0].mxu0 %v651
    %v984 = vpop.f32.mrb[0].mxu0
    %v985 = vadd.f32 0.0, %v984
    %v986 = vpop.f32.mrb[0].mxu0
    %v987 = vpop.f32.mrb[0].mxu0
    %v988 = vadd.f32 0.0, %v987
    %v989 = vpop.f32.mrb[0].mxu0
    %990 = vmatprep.mubr.bf16.mxu0 0
    %991 = vmatmul.mubr.bf16.gmra.mrb[0].mxu0 %v652
    %v992 = vpop.f32.mrb[0].mxu0
    %v993 = vadd.f32 0.0, %v992
    %v994 = vpop.f32.mrb[0].mxu0
    %v995 = vpop.f32.mrb[0].mxu0
    %v996 = vadd.f32 0.0, %v995
    %v997 = vpop.f32.mrb[0].mxu0
    %998 = vdwg.mxu0
    %v1015 = vunpack.c.l.b16 %v814
    %v1016 = vunpack.c.l.b16 %v815
    %v1017 = vunpack.c.l.b16 %v816
    %v1018 = vunpack.c.l.b16 %v817
    %v1019 = vunpack.c.l.b16 %v818
    %v1020 = vunpack.c.l.b16 %v819
    %v1021 = vunpack.c.l.b16 %v820
    %v1022 = vunpack.c.l.b16 %v821
    %v1023 = vunpack.c.l.b16 %v822
    %v1024 = vunpack.c.l.b16 %v823
    %v1025 = vunpack.c.l.b16 %v824
    %v1026 = vunpack.c.l.b16 %v825
    %v1027 = vunpack.c.l.b16 %v826
    %v1028 = vunpack.c.l.b16 %v827
    %v1029 = vunpack.c.l.b16 %v828
    %v1030 = vunpack.c.l.b16 %v829
    %v1031 = vpack.c.b16 %v1016, %v1015
    %v1032 = vpack.c.b16 %v1018, %v1017
    %v1033 = vpack.c.b16 %v1020, %v1019
    %v1034 = vpack.c.b16 %v1022, %v1021
    %v1035 = vpack.c.b16 %v1024, %v1023
    %v1036 = vpack.c.b16 %v1026, %v1025
    %v1037 = vpack.c.b16 %v1028, %v1027
    %v1038 = vpack.c.b16 %v1030, %v1029
    %1047 = vmatprep.subr.bf16.mxu0 0
    %1048 = vmatpush1.bf16.msra.mxu0 %v1031
    %1049 = vmatprep.subr.bf16.mxu0 0
    %1050 = vmatpush1.bf16.msra.mxu0 %v1032
    %1051 = vmatprep.subr.bf16.mxu0 0
    %1052 = vmatpush1.bf16.msra.mxu0 %v1033
    %1053 = vmatprep.subr.bf16.mxu0 0
    %1054 = vmatpush1.bf16.msra.mxu0 %v1034
    %1055 = vmatprep.subr.bf16.mxu0 0
    %1056 = vmatpush1.bf16.msra.mxu0 %v1035
    %1057 = vmatprep.subr.bf16.mxu0 0
    %1058 = vmatpush1.bf16.msra.mxu0 %v1036
    %1059 = vmatprep.subr.bf16.mxu0 0
    %1060 = vmatpush1.bf16.msra.mxu0 %v1037
    %1061 = vmatprep.subr.bf16.mxu0 0
    %1062 = vmatpush1.bf16.msra.mxu0 %v1038
    %1063 = vmatprep.subr.bf16.mxu0 0
    %1064 = vmatpush1.bf16.msra.mxu0 0
    %1065 = vmatprep.subr.bf16.mxu0 0
    %1066 = vmatpush1.bf16.msra.mxu0 0
    %1067 = vmatprep.subr.bf16.mxu0 0
    %1068 = vmatpush1.bf16.msra.mxu0 0
    %1069 = vmatprep.subr.bf16.mxu0 0
    %1070 = vmatpush1.bf16.msra.mxu0 0
    %1071 = vmatprep.subr.bf16.mxu0 0
    %1072 = vmatpush1.bf16.msra.mxu0 0
    %1073 = vmatprep.subr.bf16.mxu0 0
    %1074 = vmatpush1.bf16.msra.mxu0 0
    %1075 = vmatprep.subr.bf16.mxu0 0
    %1076 = vmatpush1.bf16.msra.mxu0 0
    %1077 = vmatprep.subr.bf16.mxu0 0
    %1078 = vmatpush1.bf16.msra.mxu0 0
    %1079 = vmatprep.mubr.bf16.mxu0 0
    %1080 = vmatmul.mubr.bf16.gmra.mrb[0].mxu0 %v846
    %v1081 = vpop.f32.mrb[0].mxu0
    %v1082 = vadd.f32 %v937, %v1081
    %v1083 = vpop.f32.mrb[0].mxu0
    %v1084 = vpop.f32.mrb[0].mxu0
    %v1085 = vadd.f32 %v940, %v1084
    %v1086 = vpop.f32.mrb[0].mxu0
    %1087 = vmatprep.mubr.bf16.mxu0 0
    %1088 = vmatmul.mubr.bf16.gmra.mrb[0].mxu0 %v847
    %v1089 = vpop.f32.mrb[0].mxu0
    %v1090 = vadd.f32 %v945, %v1089
    %v1091 = vpop.f32.mrb[0].mxu0
    %v1092 = vpop.f32.mrb[0].mxu0
    %v1093 = vadd.f32 %v948, %v1092
    %v1094 = vpop.f32.mrb[0].mxu0
    %1095 = vmatprep.mubr.bf16.mxu0 0
    %1096 = vmatmul.mubr.bf16.gmra.mrb[0].mxu0 %v848
    %v1097 = vpop.f32.mrb[0].mxu0
    %v1098 = vadd.f32 %v953, %v1097
    %v1099 = vpop.f32.mrb[0].mxu0
    %v1100 = vpop.f32.mrb[0].mxu0
    %v1101 = vadd.f32 %v956, %v1100
    %v1102 = vpop.f32.mrb[0].mxu0
    %1103 = vmatprep.mubr.bf16.mxu0 0
    %1104 = vmatmul.mubr.bf16.gmra.mrb[0].mxu0 %v849
    %v1105 = vpop.f32.mrb[0].mxu0
    %v1106 = vadd.f32 %v961, %v1105
    %v1107 = vpop.f32.mrb[0].mxu0
    %v1108 = vpop.f32.mrb[0].mxu0
    %v1109 = vadd.f32 %v964, %v1108
    %v1110 = vpop.f32.mrb[0].mxu0
    %1111 = vmatprep.mubr.bf16.mxu0 0
    %1112 = vmatmul.mubr.bf16.gmra.mrb[0].mxu0 %v850
    %v1113 = vpop.f32.mrb[0].mxu0
    %v1114 = vadd.f32 %v969, %v1113
    %v1115 = vpop.f32.mrb[0].mxu0
    %v1116 = vpop.f32.mrb[0].mxu0
    %v1117 = vadd.f32 %v972, %v1116
    %v1118 = vpop.f32.mrb[0].mxu0
    %1119 = vmatprep.mubr.bf16.mxu0 0
    %1120 = vmatmul.mubr.bf16.gmra.mrb[0].mxu0 %v851
    %v1121 = vpop.f32.mrb[0].mxu0
    %v1122 = vadd.f32 %v977, %v1121
    %v1123 = vpop.f32.mrb[0].mxu0
    %v1124 = vpop.f32.mrb[0].mxu0
    %v1125 = vadd.f32 %v980, %v1124
    %v1126 = vpop.f32.mrb[0].mxu0
    %1127 = vmatprep.mubr.bf16.mxu0 0
    %1128 = vmatmul.mubr.bf16.gmra.mrb[0].mxu0 %v852
    %v1129 = vpop.f32.mrb[0].mxu0
    %v1130 = vadd.f32 %v985, %v1129
    %v1131 = vpop.f32.mrb[0].mxu0
    %v1132 = vpop.f32.mrb[0].mxu0
    %v1133 = vadd.f32 %v988, %v1132
    %v1134 = vpop.f32.mrb[0].mxu0
    %1135 = vmatprep.mubr.bf16.mxu0 0
    %1136 = vmatmul.mubr.bf16.gmra.mrb[0].mxu0 %v853
    %v1137 = vpop.f32.mrb[0].mxu0
    %v1138 = vadd.f32 %v993, %v1137
    %v1139 = vpop.f32.mrb[0].mxu0
    %v1140 = vpop.f32.mrb[0].mxu0
    %v1141 = vadd.f32 %v996, %v1140
    %v1142 = vpop.f32.mrb[0].mxu0
    %1143 = vdwg.mxu0
    %v1144 = vld [vmem:[%s5 + $0x1] sm:$0x1]
    %v1145 = vlaneseq
    %v1146 = vshrl.u32 %v1145, 7
    %v1147 = vsub.s32 0, %v1146
    %v1148 = vrot.slane %v1144, %v1147
    %v1149 = vadd.f32 %v1082, %v1148
    %v1150 = vadd.f32 %v1085, %v1148
    %v1151 = vadd.f32 %v1090, %v1148
    %v1152 = vadd.f32 %v1093, %v1148
    %v1153 = vadd.f32 %v1098, %v1148
    %v1154 = vadd.f32 %v1101, %v1148
    %v1155 = vadd.f32 %v1106, %v1148
    %v1156 = vadd.f32 %v1109, %v1148
    %v1157 = vadd.f32 %v1114, %v1148
    %v1158 = vadd.f32 %v1117, %v1148
    %v1159 = vadd.f32 %v1122, %v1148
    %v1160 = vadd.f32 %v1125, %v1148
    %v1161 = vadd.f32 %v1130, %v1148
    %v1162 = vadd.f32 %v1133, %v1148
    %v1163 = vadd.f32 %v1138, %v1148
    %v1164 = vadd.f32 %v1141, %v1148
    %v1165 = vmax.f32 %v1149, 0.0
    %v1166 = vmax.f32 %v1150, 0.0
    %v1167 = vmax.f32 %v1151, 0.0
    %v1168 = vmax.f32 %v1152, 0.0
    %v1169 = vmax.f32 %v1153, 0.0
    %v1170 = vmax.f32 %v1154, 0.0
    %v1171 = vmax.f32 %v1155, 0.0
    %v1172 = vmax.f32 %v1156, 0.0
    %v1173 = vmax.f32 %v1157, 0.0
    %v1174 = vmax.f32 %v1158, 0.0
    %v1175 = vmax.f32 %v1159, 0.0
    %v1176 = vmax.f32 %v1160, 0.0
    %v1177 = vmax.f32 %v1161, 0.0
    %v1178 = vmax.f32 %v1162, 0.0
    %v1179 = vmax.f32 %v1163, 0.0
    %v1180 = vmax.f32 %v1164, 0.0
    %v1181 = vpack.c.bf16 %v1166, %v1165
    %v1182 = vpack.c.bf16 %v1168, %v1167
    %v1183 = vpack.c.bf16 %v1170, %v1169
    %v1184 = vpack.c.bf16 %v1172, %v1171
    %v1185 = vpack.c.bf16 %v1174, %v1173
    %v1186 = vpack.c.bf16 %v1176, %v1175
    %v1187 = vpack.c.bf16 %v1178, %v1177
    %v1188 = vpack.c.bf16 %v1180, %v1179
    %v1189 = vld [vmem:[#allocation2] sm:$0xf]
    %v1190 = vld [vmem:[#allocation2 + $0x4] sm:$0xf]
    %v1191 = vld [vmem:[#allocation2 + $0x8] sm:$0xf]
    %v1192 = vld [vmem:[#allocation2 + $0xc] sm:$0xf]
    %v1193 = vld [vmem:[#allocation2 + $0x10] sm:$0xf]
    %v1194 = vld [vmem:[#allocation2 + $0x14] sm:$0xf]
    %v1195 = vld [vmem:[#allocation2 + $0x18] sm:$0xf]
    %v1196 = vld [vmem:[#allocation2 + $0x1c] sm:$0xf]
    %v1197 = vld [vmem:[#allocation2 + $0x20] sm:$0xf]
    %v1198 = vld [vmem:[#allocation2 + $0x24] sm:$0xf]
    %v1199 = vld [vmem:[#allocation2 + $0x28] sm:$0xf]
    %v1200 = vld [vmem:[#allocation2 + $0x2c] sm:$0xf]
    %v1201 = vld [vmem:[#allocation2 + $0x30] sm:$0xf]
    %v1202 = vld [vmem:[#allocation2 + $0x34] sm:$0xf]
    %v1203 = vld [vmem:[#allocation2 + $0x38] sm:$0xf]
    %v1204 = vld [vmem:[#allocation2 + $0x3c] sm:$0xf]
    %v1221 = vunpack.c.l.b16 %v1189
    %v1222 = vunpack.c.l.b16 %v1190
    %v1223 = vunpack.c.l.b16 %v1191
    %v1224 = vunpack.c.l.b16 %v1192
    %v1225 = vunpack.c.l.b16 %v1193
    %v1226 = vunpack.c.l.b16 %v1194
    %v1227 = vunpack.c.l.b16 %v1195
    %v1228 = vunpack.c.l.b16 %v1196
    %v1229 = vunpack.c.l.b16 %v1197
    %v1230 = vunpack.c.l.b16 %v1198
    %v1231 = vunpack.c.l.b16 %v1199
    %v1232 = vunpack.c.l.b16 %v1200
    %v1233 = vunpack.c.l.b16 %v1201
    %v1234 = vunpack.c.l.b16 %v1202
    %v1235 = vunpack.c.l.b16 %v1203
    %v1236 = vunpack.c.l.b16 %v1204
    %v1237 = vpack.c.b16 %v1222, %v1221
    %v1238 = vpack.c.b16 %v1224, %v1223
    %v1239 = vpack.c.b16 %v1226, %v1225
    %v1240 = vpack.c.b16 %v1228, %v1227
    %v1241 = vpack.c.b16 %v1230, %v1229
    %v1242 = vpack.c.b16 %v1232, %v1231
    %v1243 = vpack.c.b16 %v1234, %v1233
    %v1244 = vpack.c.b16 %v1236, %v1235
    %1253 = vmatprep.subr.bf16.mxu0 0
    %1254 = vmatpush1.bf16.msra.mxu0 %v1181
    %1255 = vmatprep.subr.bf16.mxu0 0
    %1256 = vmatpush1.bf16.msra.mxu0 %v1182
    %1257 = vmatprep.subr.bf16.mxu0 0
    %1258 = vmatpush1.bf16.msra.mxu0 %v1183
    %1259 = vmatprep.subr.bf16.mxu0 0
    %1260 = vmatpush1.bf16.msra.mxu0 %v1184
    %1261 = vmatprep.subr.bf16.mxu0 0
    %1262 = vmatpush1.bf16.msra.mxu0 %v1185
    %1263 = vmatprep.subr.bf16.mxu0 0
    %1264 = vmatpush1.bf16.msra.mxu0 %v1186
    %1265 = vmatprep.subr.bf16.mxu0 0
    %1266 = vmatpush1.bf16.msra.mxu0 %v1187
    %1267 = vmatprep.subr.bf16.mxu0 0
    %1268 = vmatpush1.bf16.msra.mxu0 %v1188
    %1269 = vmatprep.subr.bf16.mxu0 0
    %1270 = vmatpush1.bf16.msra.mxu0 0
    %1271 = vmatprep.subr.bf16.mxu0 0
    %1272 = vmatpush1.bf16.msra.mxu0 0
    %1273 = vmatprep.subr.bf16.mxu0 0
    %1274 = vmatpush1.bf16.msra.mxu0 0
    %1275 = vmatprep.subr.bf16.mxu0 0
    %1276 = vmatpush1.bf16.msra.mxu0 0
    %1277 = vmatprep.subr.bf16.mxu0 0
    %1278 = vmatpush1.bf16.msra.mxu0 0
    %1279 = vmatprep.subr.bf16.mxu0 0
    %1280 = vmatpush1.bf16.msra.mxu0 0
    %1281 = vmatprep.subr.bf16.mxu0 0
    %1282 = vmatpush1.bf16.msra.mxu0 0
    %1283 = vmatprep.subr.bf16.mxu0 0
    %1284 = vmatpush1.bf16.msra.mxu0 0
    %1285 = vmatprep.mubr.bf16.mxu0 0
    %1286 = vmatmul.mubr.bf16.gmra.mrb[0].mxu0 %v1237
    %v1287 = vpop.f32.mrb[0].mxu0
    %v1288 = vadd.f32 0.0, %v1287
    %v1289 = vpop.f32.mrb[0].mxu0
    %v1290 = vpop.f32.mrb[0].mxu0
    %v1291 = vadd.f32 0.0, %v1290
    %v1292 = vpop.f32.mrb[0].mxu0
    %1293 = vmatprep.mubr.bf16.mxu0 0
    %1294 = vmatmul.mubr.bf16.gmra.mrb[0].mxu0 %v1238
    %v1295 = vpop.f32.mrb[0].mxu0
    %v1296 = vadd.f32 0.0, %v1295
    %v1297 = vpop.f32.mrb[0].mxu0
    %v1298 = vpop.f32.mrb[0].mxu0
    %v1299 = vadd.f32 0.0, %v1298
    %v1300 = vpop.f32.mrb[0].mxu0
    %1301 = vmatprep.mubr.bf16.mxu0 0
    %1302 = vmatmul.mubr.bf16.gmra.mrb[0].mxu0 %v1239
    %v1303 = vpop.f32.mrb[0].mxu0
    %v1304 = vadd.f32 0.0, %v1303
    %v1305 = vpop.f32.mrb[0].mxu0
    %v1306 = vpop.f32.mrb[0].mxu0
    %v1307 = vadd.f32 0.0, %v1306
    %v1308 = vpop.f32.mrb[0].mxu0
    %1309 = vmatprep.mubr.bf16.mxu0 0
    %1310 = vmatmul.mubr.bf16.gmra.mrb[0].mxu0 %v1240
    %v1311 = vpop.f32.mrb[0].mxu0
    %v1312 = vadd.f32 0.0, %v1311
    %v1313 = vpop.f32.mrb[0].mxu0
    %v1314 = vpop.f32.mrb[0].mxu0
    %v1315 = vadd.f32 0.0, %v1314
    %v1316 = vpop.f32.mrb[0].mxu0
    %1317 = vmatprep.mubr.bf16.mxu0 0
    %1318 = vmatmul.mubr.bf16.gmra.mrb[0].mxu0 %v1241
    %v1319 = vpop.f32.mrb[0].mxu0
    %v1320 = vadd.f32 0.0, %v1319
    %v1321 = vpop.f32.mrb[0].mxu0
    %v1322 = vpop.f32.mrb[0].mxu0
    %v1323 = vadd.f32 0.0, %v1322
    %v1324 = vpop.f32.mrb[0].mxu0
    %1325 = vmatprep.mubr.bf16.mxu0 0
    %1326 = vmatmul.mubr.bf16.gmra.mrb[0].mxu0 %v1242
    %v1327 = vpop.f32.mrb[0].mxu0
    %v1328 = vadd.f32 0.0, %v1327
    %v1329 = vpop.f32.mrb[0].mxu0
    %v1330 = vpop.f32.mrb[0].mxu0
    %v1331 = vadd.f32 0.0, %v1330
    %v1332 = vpop.f32.mrb[0].mxu0
    %1333 = vmatprep.mubr.bf16.mxu0 0
    %1334 = vmatmul.mubr.bf16.gmra.mrb[0].mxu0 %v1243
    %v1335 = vpop.f32.mrb[0].mxu0
    %v1336 = vadd.f32 0.0, %v1335
    %v1337 = vpop.f32.mrb[0].mxu0
    %v1338 = vpop.f32.mrb[0].mxu0
    %v1339 = vadd.f32 0.0, %v1338
    %v1340 = vpop.f32.mrb[0].mxu0
    %1341 = vmatprep.mubr.bf16.mxu0 0
    %1342 = vmatmul.mubr.bf16.gmra.mrb[0].mxu0 %v1244
    %v1343 = vpop.f32.mrb[0].mxu0
    %v1344 = vadd.f32 0.0, %v1343
    %v1345 = vpop.f32.mrb[0].mxu0
    %v1346 = vpop.f32.mrb[0].mxu0
    %v1347 = vadd.f32 0.0, %v1346
    %v1348 = vpop.f32.mrb[0].mxu0
    %1349 = vdwg.mxu0
    %v1350 = vld [vmem:[#allocation5 + $0x100] sm:$0xf]
    %v1351 = vld [vmem:[#allocation5 + $0x104] sm:$0xf]
    %v1352 = vld [vmem:[#allocation5 + $0x108] sm:$0xf]
    %v1353 = vld [vmem:[#allocation5 + $0x10c] sm:$0xf]
    %v1354 = vld [vmem:[#allocation5 + $0x110] sm:$0xf]
    %v1355 = vld [vmem:[#allocation5 + $0x114] sm:$0xf]
    %v1356 = vld [vmem:[#allocation5 + $0x118] sm:$0xf]
    %v1357 = vld [vmem:[#allocation5 + $0x11c] sm:$0xf]
    %v1358 = vld [vmem:[#allocation5 + $0x120] sm:$0xf]
    %v1359 = vld [vmem:[#allocation5 + $0x124] sm:$0xf]
    %v1360 = vld [vmem:[#allocation5 + $0x128] sm:$0xf]
    %v1361 = vld [vmem:[#allocation5 + $0x12c] sm:$0xf]
    %v1362 = vld [vmem:[#allocation5 + $0x130] sm:$0xf]
    %v1363 = vld [vmem:[#allocation5 + $0x134] sm:$0xf]
    %v1364 = vld [vmem:[#allocation5 + $0x138] sm:$0xf]
    %v1365 = vld [vmem:[#allocation5 + $0x13c] sm:$0xf]
    %v1366 = vld [vmem:[#allocation5 + $0x140] sm:$0xf]
    %v1367 = vld [vmem:[#allocation5 + $0x144] sm:$0xf]
    %v1368 = vld [vmem:[#allocation5 + $0x148] sm:$0xf]
    %v1369 = vld [vmem:[#allocation5 + $0x14c] sm:$0xf]
    %v1370 = vld [vmem:[#allocation5 + $0x150] sm:$0xf]
    %v1371 = vld [vmem:[#allocation5 + $0x154] sm:$0xf]
    %v1372 = vld [vmem:[#allocation5 + $0x158] sm:$0xf]
    %v1373 = vld [vmem:[#allocation5 + $0x15c] sm:$0xf]
    %v1374 = vld [vmem:[#allocation5 + $0x160] sm:$0xf]
    %v1375 = vld [vmem:[#allocation5 + $0x164] sm:$0xf]
    %v1376 = vld [vmem:[#allocation5 + $0x168] sm:$0xf]
    %v1377 = vld [vmem:[#allocation5 + $0x16c] sm:$0xf]
    %v1378 = vld [vmem:[#allocation5 + $0x170] sm:$0xf]
    %v1379 = vld [vmem:[#allocation5 + $0x174] sm:$0xf]
    %v1380 = vld [vmem:[#allocation5 + $0x178] sm:$0xf]
    %v1381 = vld [vmem:[#allocation5 + $0x17c] sm:$0xf]
    %v1382 = vpack.c.bf16 %v1291, %v1288
    %v1383 = vpack.c.bf16 %v1299, %v1296
    %v1384 = vpack.c.bf16 %v1307, %v1304
    %v1385 = vpack.c.bf16 %v1315, %v1312
    %v1386 = vpack.c.bf16 %v1323, %v1320
    %v1387 = vpack.c.bf16 %v1331, %v1328
    %v1388 = vpack.c.bf16 %v1339, %v1336
    %v1389 = vpack.c.bf16 %v1347, %v1344
    %v1406 = vunpack.c.l.b16 %v1366
    %v1407 = vunpack.c.l.b16 %v1367
    %v1408 = vunpack.c.l.b16 %v1368
    %v1409 = vunpack.c.l.b16 %v1369
    %v1410 = vunpack.c.l.b16 %v1370
    %v1411 = vunpack.c.l.b16 %v1371
    %v1412 = vunpack.c.l.b16 %v1372
    %v1413 = vunpack.c.l.b16 %v1373
    %v1414 = vunpack.c.l.b16 %v1374
    %v1415 = vunpack.c.l.b16 %v1375
    %v1416 = vunpack.c.l.b16 %v1376
    %v1417 = vunpack.c.l.b16 %v1377
    %v1418 = vunpack.c.l.b16 %v1378
    %v1419 = vunpack.c.l.b16 %v1379
    %v1420 = vunpack.c.l.b16 %v1380
    %v1421 = vunpack.c.l.b16 %v1381
    %v1422 = vpack.c.b16 %v1407, %v1406
    %v1423 = vpack.c.b16 %v1409, %v1408
    %v1424 = vpack.c.b16 %v1411, %v1410
    %v1425 = vpack.c.b16 %v1413, %v1412
    %v1426 = vpack.c.b16 %v1415, %v1414
    %v1427 = vpack.c.b16 %v1417, %v1416
    %v1428 = vpack.c.b16 %v1419, %v1418
    %v1429 = vpack.c.b16 %v1421, %v1420
    %1438 = vmatprep.subr.bf16.mxu0 0
    %1439 = vmatpush1.bf16.msra.mxu0 %v1422
    %1440 = vmatprep.subr.bf16.mxu0 0
    %1441 = vmatpush1.bf16.msra.mxu0 %v1423
    %1442 = vmatprep.subr.bf16.mxu0 0
    %1443 = vmatpush1.bf16.msra.mxu0 %v1424
    %1444 = vmatprep.subr.bf16.mxu0 0
    %1445 = vmatpush1.bf16.msra.mxu0 %v1425
    %1446 = vmatprep.subr.bf16.mxu0 0
    %1447 = vmatpush1.bf16.msra.mxu0 %v1426
    %1448 = vmatprep.subr.bf16.mxu0 0
    %1449 = vmatpush1.bf16.msra.mxu0 %v1427
    %1450 = vmatprep.subr.bf16.mxu0 0
    %1451 = vmatpush1.bf16.msra.mxu0 %v1428
    %1452 = vmatprep.subr.bf16.mxu0 0
    %1453 = vmatpush1.bf16.msra.mxu0 %v1429
    %1454 = vmatprep.subr.bf16.mxu0 0
    %1455 = vmatpush1.bf16.msra.mxu0 0
    %1456 = vmatprep.subr.bf16.mxu0 0
    %1457 = vmatpush1.bf16.msra.mxu0 0
    %1458 = vmatprep.subr.bf16.mxu0 0
    %1459 = vmatpush1.bf16.msra.mxu0 0
    %1460 = vmatprep.subr.bf16.mxu0 0
    %1461 = vmatpush1.bf16.msra.mxu0 0
    %1462 = vmatprep.subr.bf16.mxu0 0
    %1463 = vmatpush1.bf16.msra.mxu0 0
    %1464 = vmatprep.subr.bf16.mxu0 0
    %1465 = vmatpush1.bf16.msra.mxu0 0
    %1466 = vmatprep.subr.bf16.mxu0 0
    %1467 = vmatpush1.bf16.msra.mxu0 0
    %1468 = vmatprep.subr.bf16.mxu0 0
    %1469 = vmatpush1.bf16.msra.mxu0 0
    %1470 = vmatprep.mubr.bf16.mxu0 0
    %1471 = vmatmul.mubr.bf16.gmra.mrb[0].mxu0 %v1181
    %v1472 = vpop.f32.mrb[0].mxu0
    %v1473 = vadd.f32 0.0, %v1472
    %v1474 = vpop.f32.mrb[0].mxu0
    %v1475 = vpop.f32.mrb[0].mxu0
    %v1476 = vadd.f32 0.0, %v1475
    %v1477 = vpop.f32.mrb[0].mxu0
    %1478 = vmatprep.mubr.bf16.mxu0 0
    %1479 = vmatmul.mubr.bf16.gmra.mrb[0].mxu0 %v1182
    %v1480 = vpop.f32.mrb[0].mxu0
    %v1481 = vadd.f32 0.0, %v1480
    %v1482 = vpop.f32.mrb[0].mxu0
    %v1483 = vpop.f32.mrb[0].mxu0
    %v1484 = vadd.f32 0.0, %v1483
    %v1485 = vpop.f32.mrb[0].mxu0
    %1486 = vmatprep.mubr.bf16.mxu0 0
    %1487 = vmatmul.mubr.bf16.gmra.mrb[0].mxu0 %v1183
    %v1488 = vpop.f32.mrb[0].mxu0
    %v1489 = vadd.f32 0.0, %v1488
    %v1490 = vpop.f32.mrb[0].mxu0
    %v1491 = vpop.f32.mrb[0].mxu0
    %v1492 = vadd.f32 0.0, %v1491
    %v1493 = vpop.f32.mrb[0].mxu0
    %1494 = vmatprep.mubr.bf16.mxu0 0
    %1495 = vmatmul.mubr.bf16.gmra.mrb[0].mxu0 %v1184
    %v1496 = vpop.f32.mrb[0].mxu0
    %v1497 = vadd.f32 0.0, %v1496
    %v1498 = vpop.f32.mrb[0].mxu0
    %v1499 = vpop.f32.mrb[0].mxu0
    %v1500 = vadd.f32 0.0, %v1499
    %v1501 = vpop.f32.mrb[0].mxu0
    %1502 = vmatprep.mubr.bf16.mxu0 0
    %1503 = vmatmul.mubr.bf16.gmra.mrb[0].mxu0 %v1185
    %v1504 = vpop.f32.mrb[0].mxu0
    %v1505 = vadd.f32 0.0, %v1504
    %v1506 = vpop.f32.mrb[0].mxu0
    %v1507 = vpop.f32.mrb[0].mxu0
    %v1508 = vadd.f32 0.0, %v1507
    %v1509 = vpop.f32.mrb[0].mxu0
    %1510 = vmatprep.mubr.bf16.mxu0 0
    %1511 = vmatmul.mubr.bf16.gmra.mrb[0].mxu0 %v1186
    %v1512 = vpop.f32.mrb[0].mxu0
    %v1513 = vadd.f32 0.0, %v1512
    %v1514 = vpop.f32.mrb[0].mxu0
    %v1515 = vpop.f32.mrb[0].mxu0
    %v1516 = vadd.f32 0.0, %v1515
    %v1517 = vpop.f32.mrb[0].mxu0
    %1518 = vmatprep.mubr.bf16.mxu0 0
    %1519 = vmatmul.mubr.bf16.gmra.mrb[0].mxu0 %v1187
    %v1520 = vpop.f32.mrb[0].mxu0
    %v1521 = vadd.f32 0.0, %v1520
    %v1522 = vpop.f32.mrb[0].mxu0
    %v1523 = vpop.f32.mrb[0].mxu0
    %v1524 = vadd.f32 0.0, %v1523
    %v1525 = vpop.f32.mrb[0].mxu0
    %1526 = vmatprep.mubr.bf16.mxu0 0
    %1527 = vmatmul.mubr.bf16.gmra.mrb[0].mxu0 %v1188
    %v1528 = vpop.f32.mrb[0].mxu0
    %v1529 = vadd.f32 0.0, %v1528
    %v1530 = vpop.f32.mrb[0].mxu0
    %v1531 = vpop.f32.mrb[0].mxu0
    %v1532 = vadd.f32 0.0, %v1531
    %v1533 = vpop.f32.mrb[0].mxu0
    %1534 = vdwg.mxu0
    %v1551 = vunpack.c.l.b16 %v1350
    %v1552 = vunpack.c.l.b16 %v1351
    %v1553 = vunpack.c.l.b16 %v1352
    %v1554 = vunpack.c.l.b16 %v1353
    %v1555 = vunpack.c.l.b16 %v1354
    %v1556 = vunpack.c.l.b16 %v1355
    %v1557 = vunpack.c.l.b16 %v1356
    %v1558 = vunpack.c.l.b16 %v1357
    %v1559 = vunpack.c.l.b16 %v1358
    %v1560 = vunpack.c.l.b16 %v1359
    %v1561 = vunpack.c.l.b16 %v1360
    %v1562 = vunpack.c.l.b16 %v1361
    %v1563 = vunpack.c.l.b16 %v1362
    %v1564 = vunpack.c.l.b16 %v1363
    %v1565 = vunpack.c.l.b16 %v1364
    %v1566 = vunpack.c.l.b16 %v1365
    %v1567 = vpack.c.b16 %v1552, %v1551
    %v1568 = vpack.c.b16 %v1554, %v1553
    %v1569 = vpack.c.b16 %v1556, %v1555
    %v1570 = vpack.c.b16 %v1558, %v1557
    %v1571 = vpack.c.b16 %v1560, %v1559
    %v1572 = vpack.c.b16 %v1562, %v1561
    %v1573 = vpack.c.b16 %v1564, %v1563
    %v1574 = vpack.c.b16 %v1566, %v1565
    %1583 = vmatprep.subr.bf16.mxu0 0
    %1584 = vmatpush1.bf16.msra.mxu0 %v1567
    %1585 = vmatprep.subr.bf16.mxu0 0
    %1586 = vmatpush1.bf16.msra.mxu0 %v1568
    %1587 = vmatprep.subr.bf16.mxu0 0
    %1588 = vmatpush1.bf16.msra.mxu0 %v1569
    %1589 = vmatprep.subr.bf16.mxu0 0
    %1590 = vmatpush1.bf16.msra.mxu0 %v1570
    %1591 = vmatprep.subr.bf16.mxu0 0
    %1592 = vmatpush1.bf16.msra.mxu0 %v1571
    %1593 = vmatprep.subr.bf16.mxu0 0
    %1594 = vmatpush1.bf16.msra.mxu0 %v1572
    %1595 = vmatprep.subr.bf16.mxu0 0
    %1596 = vmatpush1.bf16.msra.mxu0 %v1573
    %1597 = vmatprep.subr.bf16.mxu0 0
    %1598 = vmatpush1.bf16.msra.mxu0 %v1574
    %1599 = vmatprep.subr.bf16.mxu0 0
    %1600 = vmatpush1.bf16.msra.mxu0 0
    %1601 = vmatprep.subr.bf16.mxu0 0
    %1602 = vmatpush1.bf16.msra.mxu0 0
    %1603 = vmatprep.subr.bf16.mxu0 0
    %1604 = vmatpush1.bf16.msra.mxu0 0
    %1605 = vmatprep.subr.bf16.mxu0 0
    %1606 = vmatpush1.bf16.msra.mxu0 0
    %1607 = vmatprep.subr.bf16.mxu0 0
    %1608 = vmatpush1.bf16.msra.mxu0 0
    %1609 = vmatprep.subr.bf16.mxu0 0
    %1610 = vmatpush1.bf16.msra.mxu0 0
    %1611 = vmatprep.subr.bf16.mxu0 0
    %1612 = vmatpush1.bf16.msra.mxu0 0
    %1613 = vmatprep.subr.bf16.mxu0 0
    %1614 = vmatpush1.bf16.msra.mxu0 0
    %1615 = vmatprep.mubr.bf16.mxu0 0
    %1616 = vmatmul.mubr.bf16.gmra.mrb[0].mxu0 %v1382
    %v1617 = vpop.f32.mrb[0].mxu0
    %v1618 = vadd.f32 %v1473, %v1617
    %v1619 = vpop.f32.mrb[0].mxu0
    %v1620 = vpop.f32.mrb[0].mxu0
    %v1621 = vadd.f32 %v1476, %v1620
    %v1622 = vpop.f32.mrb[0].mxu0
    %1623 = vmatprep.mubr.bf16.mxu0 0
    %1624 = vmatmul.mubr.bf16.gmra.mrb[0].mxu0 %v1383
    %v1625 = vpop.f32.mrb[0].mxu0
    %v1626 = vadd.f32 %v1481, %v1625
    %v1627 = vpop.f32.mrb[0].mxu0
    %v1628 = vpop.f32.mrb[0].mxu0
    %v1629 = vadd.f32 %v1484, %v1628
    %v1630 = vpop.f32.mrb[0].mxu0
    %1631 = vmatprep.mubr.bf16.mxu0 0
    %1632 = vmatmul.mubr.bf16.gmra.mrb[0].mxu0 %v1384
    %v1633 = vpop.f32.mrb[0].mxu0
    %v1634 = vadd.f32 %v1489, %v1633
    %v1635 = vpop.f32.mrb[0].mxu0
    %v1636 = vpop.f32.mrb[0].mxu0
    %v1637 = vadd.f32 %v1492, %v1636
    %v1638 = vpop.f32.mrb[0].mxu0
    %1639 = vmatprep.mubr.bf16.mxu0 0
    %1640 = vmatmul.mubr.bf16.gmra.mrb[0].mxu0 %v1385
    %v1641 = vpop.f32.mrb[0].mxu0
    %v1642 = vadd.f32 %v1497, %v1641
    %v1643 = vpop.f32.mrb[0].mxu0
    %v1644 = vpop.f32.mrb[0].mxu0
    %v1645 = vadd.f32 %v1500, %v1644
    %v1646 = vpop.f32.mrb[0].mxu0
    %1647 = vmatprep.mubr.bf16.mxu0 0
    %1648 = vmatmul.mubr.bf16.gmra.mrb[0].mxu0 %v1386
    %v1649 = vpop.f32.mrb[0].mxu0
    %v1650 = vadd.f32 %v1505, %v1649
    %v1651 = vpop.f32.mrb[0].mxu0
    %v1652 = vpop.f32.mrb[0].mxu0
    %v1653 = vadd.f32 %v1508, %v1652
    %v1654 = vpop.f32.mrb[0].mxu0
    %1655 = vmatprep.mubr.bf16.mxu0 0
    %1656 = vmatmul.mubr.bf16.gmra.mrb[0].mxu0 %v1387
    %v1657 = vpop.f32.mrb[0].mxu0
    %v1658 = vadd.f32 %v1513, %v1657
    %v1659 = vpop.f32.mrb[0].mxu0
    %v1660 = vpop.f32.mrb[0].mxu0
    %v1661 = vadd.f32 %v1516, %v1660
    %v1662 = vpop.f32.mrb[0].mxu0
    %1663 = vmatprep.mubr.bf16.mxu0 0
    %1664 = vmatmul.mubr.bf16.gmra.mrb[0].mxu0 %v1388
    %v1665 = vpop.f32.mrb[0].mxu0
    %v1666 = vadd.f32 %v1521, %v1665
    %v1667 = vpop.f32.mrb[0].mxu0
    %v1668 = vpop.f32.mrb[0].mxu0
    %v1669 = vadd.f32 %v1524, %v1668
    %v1670 = vpop.f32.mrb[0].mxu0
    %1671 = vmatprep.mubr.bf16.mxu0 0
    %1672 = vmatmul.mubr.bf16.gmra.mrb[0].mxu0 %v1389
    %v1673 = vpop.f32.mrb[0].mxu0
    %v1674 = vadd.f32 %v1529, %v1673
    %v1675 = vpop.f32.mrb[0].mxu0
    %v1676 = vpop.f32.mrb[0].mxu0
    %v1677 = vadd.f32 %v1532, %v1676
    %v1678 = vpop.f32.mrb[0].mxu0
    %1679 = vdwg.mxu0
    %v1680 = vld [vmem:[%s5 + $0x2] sm:$0x1]
    %v1681 = vlaneseq
    %v1682 = vshrl.u32 %v1681, 7
    %v1683 = vsub.s32 0, %v1682
    %v1684 = vrot.slane %v1680, %v1683
    %v1685 = vadd.f32 %v1618, %v1684
    %v1686 = vadd.f32 %v1621, %v1684
    %v1687 = vadd.f32 %v1626, %v1684
    %v1688 = vadd.f32 %v1629, %v1684
    %v1689 = vadd.f32 %v1634, %v1684
    %v1690 = vadd.f32 %v1637, %v1684
    %v1691 = vadd.f32 %v1642, %v1684
    %v1692 = vadd.f32 %v1645, %v1684
    %v1693 = vadd.f32 %v1650, %v1684
    %v1694 = vadd.f32 %v1653, %v1684
    %v1695 = vadd.f32 %v1658, %v1684
    %v1696 = vadd.f32 %v1661, %v1684
    %v1697 = vadd.f32 %v1666, %v1684
    %v1698 = vadd.f32 %v1669, %v1684
    %v1699 = vadd.f32 %v1674, %v1684
    %v1700 = vadd.f32 %v1677, %v1684
    %v1701 = vmax.f32 %v1685, 0.0
    %v1702 = vmax.f32 %v1686, 0.0
    %v1703 = vmax.f32 %v1687, 0.0
    %v1704 = vmax.f32 %v1688, 0.0
    %v1705 = vmax.f32 %v1689, 0.0
    %v1706 = vmax.f32 %v1690, 0.0
    %v1707 = vmax.f32 %v1691, 0.0
    %v1708 = vmax.f32 %v1692, 0.0
    %v1709 = vmax.f32 %v1693, 0.0
    %v1710 = vmax.f32 %v1694, 0.0
    %v1711 = vmax.f32 %v1695, 0.0
    %v1712 = vmax.f32 %v1696, 0.0
    %v1713 = vmax.f32 %v1697, 0.0
    %v1714 = vmax.f32 %v1698, 0.0
    %v1715 = vmax.f32 %v1699, 0.0
    %v1716 = vmax.f32 %v1700, 0.0
    %v1717 = vpack.c.bf16 %v1702, %v1701
    %v1718 = vpack.c.bf16 %v1704, %v1703
    %v1719 = vpack.c.bf16 %v1706, %v1705
    %v1720 = vpack.c.bf16 %v1708, %v1707
    %v1721 = vpack.c.bf16 %v1710, %v1709
    %v1722 = vpack.c.bf16 %v1712, %v1711
    %v1723 = vpack.c.bf16 %v1714, %v1713
    %v1724 = vpack.c.bf16 %v1716, %v1715
    %v1725 = vld [vmem:[#allocation5 + $0x180] sm:$0xf]
    %v1726 = vld [vmem:[#allocation5 + $0x184] sm:$0xf]
    %v1727 = vld [vmem:[#allocation5 + $0x188] sm:$0xf]
    %v1728 = vld [vmem:[#allocation5 + $0x18c] sm:$0xf]
    %v1729 = vld [vmem:[#allocation5 + $0x190] sm:$0xf]
    %v1730 = vld [vmem:[#allocation5 + $0x194] sm:$0xf]
    %v1731 = vld [vmem:[#allocation5 + $0x198] sm:$0xf]
    %v1732 = vld [vmem:[#allocation5 + $0x19c] sm:$0xf]
    %v1733 = vld [vmem:[#allocation5 + $0x1a0] sm:$0xf]
    %v1734 = vld [vmem:[#allocation5 + $0x1a4] sm:$0xf]
    %v1735 = vld [vmem:[#allocation5 + $0x1a8] sm:$0xf]
    %v1736 = vld [vmem:[#allocation5 + $0x1ac] sm:$0xf]
    %v1737 = vld [vmem:[#allocation5 + $0x1b0] sm:$0xf]
    %v1738 = vld [vmem:[#allocation5 + $0x1b4] sm:$0xf]
    %v1739 = vld [vmem:[#allocation5 + $0x1b8] sm:$0xf]
    %v1740 = vld [vmem:[#allocation5 + $0x1bc] sm:$0xf]
    %v1741 = vld [vmem:[%s5 + $0x3] sm:$0x1]
    %v1742 = vlaneseq
    %v1743 = vshrl.u32 %v1742, 7
    %v1744 = vsub.s32 0, %v1743
    %v1745 = vrot.slane %v1741, %v1744
    %v1762 = vunpack.c.l.b16 %v1725
    %v1763 = vunpack.c.l.b16 %v1726
    %v1764 = vunpack.c.l.b16 %v1727
    %v1765 = vunpack.c.l.b16 %v1728
    %v1766 = vunpack.c.l.b16 %v1729
    %v1767 = vunpack.c.l.b16 %v1730
    %v1768 = vunpack.c.l.b16 %v1731
    %v1769 = vunpack.c.l.b16 %v1732
    %v1770 = vunpack.c.l.b16 %v1733
    %v1771 = vunpack.c.l.b16 %v1734
    %v1772 = vunpack.c.l.b16 %v1735
    %v1773 = vunpack.c.l.b16 %v1736
    %v1774 = vunpack.c.l.b16 %v1737
    %v1775 = vunpack.c.l.b16 %v1738
    %v1776 = vunpack.c.l.b16 %v1739
    %v1777 = vunpack.c.l.b16 %v1740
    %v1778 = vpack.c.b16 %v1763, %v1762
    %v1779 = vpack.c.b16 %v1765, %v1764
    %v1780 = vpack.c.b16 %v1767, %v1766
    %v1781 = vpack.c.b16 %v1769, %v1768
    %v1782 = vpack.c.b16 %v1771, %v1770
    %v1783 = vpack.c.b16 %v1773, %v1772
    %v1784 = vpack.c.b16 %v1775, %v1774
    %v1785 = vpack.c.b16 %v1777, %v1776
    %1794 = vmatprep.subr.bf16.mxu0 0
    %1795 = vmatpush1.bf16.msra.mxu0 %v1778
    %1796 = vmatprep.subr.bf16.mxu0 0
    %1797 = vmatpush1.bf16.msra.mxu0 %v1779
    %1798 = vmatprep.subr.bf16.mxu0 0
    %1799 = vmatpush1.bf16.msra.mxu0 %v1780
    %1800 = vmatprep.subr.bf16.mxu0 0
    %1801 = vmatpush1.bf16.msra.mxu0 %v1781
    %1802 = vmatprep.subr.bf16.mxu0 0
    %1803 = vmatpush1.bf16.msra.mxu0 %v1782
    %1804 = vmatprep.subr.bf16.mxu0 0
    %1805 = vmatpush1.bf16.msra.mxu0 %v1783
    %1806 = vmatprep.subr.bf16.mxu0 0
    %1807 = vmatpush1.bf16.msra.mxu0 %v1784
    %1808 = vmatprep.subr.bf16.mxu0 0
    %1809 = vmatpush1.bf16.msra.mxu0 %v1785
    %1810 = vmatprep.subr.bf16.mxu0 0
    %1811 = vmatpush1.bf16.msra.mxu0 0
    %1812 = vmatprep.subr.bf16.mxu0 0
    %1813 = vmatpush1.bf16.msra.mxu0 0
    %1814 = vmatprep.subr.bf16.mxu0 0
    %1815 = vmatpush1.bf16.msra.mxu0 0
    %1816 = vmatprep.subr.bf16.mxu0 0
    %1817 = vmatpush1.bf16.msra.mxu0 0
    %1818 = vmatprep.subr.bf16.mxu0 0
    %1819 = vmatpush1.bf16.msra.mxu0 0
    %1820 = vmatprep.subr.bf16.mxu0 0
    %1821 = vmatpush1.bf16.msra.mxu0 0
    %1822 = vmatprep.subr.bf16.mxu0 0
    %1823 = vmatpush1.bf16.msra.mxu0 0
    %1824 = vmatprep.subr.bf16.mxu0 0
    %1825 = vmatpush1.bf16.msra.mxu0 0
    %1826 = vmatprep.mubr.bf16.mxu0 0
    %1827 = vmatmul.mubr.bf16.gmra.mrb[0].mxu0 %v1717
    %v1828 = vpop.f32.mrb[0].mxu0
    %v1829 = vadd.f32 %v1745, %v1828
    %v1830 = vpop.f32.mrb[0].mxu0
    %v1831 = vpop.f32.mrb[0].mxu0
    %v1832 = vadd.f32 %v1745, %v1831
    %v1833 = vpop.f32.mrb[0].mxu0
    %1834 = vmatprep.mubr.bf16.mxu0 0
    %1835 = vmatmul.mubr.bf16.gmra.mrb[0].mxu0 %v1718
    %v1836 = vpop.f32.mrb[0].mxu0
    %v1837 = vadd.f32 %v1745, %v1836
    %v1838 = vpop.f32.mrb[0].mxu0
    %v1839 = vpop.f32.mrb[0].mxu0
    %v1840 = vadd.f32 %v1745, %v1839
    %v1841 = vpop.f32.mrb[0].mxu0
    %1842 = vmatprep.mubr.bf16.mxu0 0
    %1843 = vmatmul.mubr.bf16.gmra.mrb[0].mxu0 %v1719
    %v1844 = vpop.f32.mrb[0].mxu0
    %v1845 = vadd.f32 %v1745, %v1844
    %v1846 = vpop.f32.mrb[0].mxu0
    %v1847 = vpop.f32.mrb[0].mxu0
    %v1848 = vadd.f32 %v1745, %v1847
    %v1849 = vpop.f32.mrb[0].mxu0
    %1850 = vmatprep.mubr.bf16.mxu0 0
    %1851 = vmatmul.mubr.bf16.gmra.mrb[0].mxu0 %v1720
    %v1852 = vpop.f32.mrb[0].mxu0
    %v1853 = vadd.f32 %v1745, %v1852
    %v1854 = vpop.f32.mrb[0].mxu0
    %v1855 = vpop.f32.mrb[0].mxu0
    %v1856 = vadd.f32 %v1745, %v1855
    %v1857 = vpop.f32.mrb[0].mxu0
    %1858 = vmatprep.mubr.bf16.mxu0 0
    %1859 = vmatmul.mubr.bf16.gmra.mrb[0].mxu0 %v1721
    %v1860 = vpop.f32.mrb[0].mxu0
    %v1861 = vadd.f32 %v1745, %v1860
    %v1862 = vpop.f32.mrb[0].mxu0
    %v1863 = vpop.f32.mrb[0].mxu0
    %v1864 = vadd.f32 %v1745, %v1863
    %v1865 = vpop.f32.mrb[0].mxu0
    %1866 = vmatprep.mubr.bf16.mxu0 0
    %1867 = vmatmul.mubr.bf16.gmra.mrb[0].mxu0 %v1722
    %v1868 = vpop.f32.mrb[0].mxu0
    %v1869 = vadd.f32 %v1745, %v1868
    %v1870 = vpop.f32.mrb[0].mxu0
    %v1871 = vpop.f32.mrb[0].mxu0
    %v1872 = vadd.f32 %v1745, %v1871
    %v1873 = vpop.f32.mrb[0].mxu0
    %1874 = vmatprep.mubr.bf16.mxu0 0
    %1875 = vmatmul.mubr.bf16.gmra.mrb[0].mxu0 %v1723
    %v1876 = vpop.f32.mrb[0].mxu0
    %v1877 = vadd.f32 %v1745, %v1876
    %v1878 = vpop.f32.mrb[0].mxu0
    %v1879 = vpop.f32.mrb[0].mxu0
    %v1880 = vadd.f32 %v1745, %v1879
    %v1881 = vpop.f32.mrb[0].mxu0
    %1882 = vmatprep.mubr.bf16.mxu0 0
    %1883 = vmatmul.mubr.bf16.gmra.mrb[0].mxu0 %v1724
    %v1884 = vpop.f32.mrb[0].mxu0
    %v1885 = vadd.f32 %v1745, %v1884
    %v1886 = vpop.f32.mrb[0].mxu0
    %v1887 = vpop.f32.mrb[0].mxu0
    %v1888 = vadd.f32 %v1745, %v1887
    %v1889 = vpop.f32.mrb[0].mxu0
    %1890 = vdwg.mxu0
    %v1891 = vmax.f32 %v1829, 0.0
    %v1892 = vmax.f32 %v1832, 0.0
    %v1893 = vmax.f32 %v1837, 0.0
    %v1894 = vmax.f32 %v1840, 0.0
    %v1895 = vmax.f32 %v1845, 0.0
    %v1896 = vmax.f32 %v1848, 0.0
    %v1897 = vmax.f32 %v1853, 0.0
    %v1898 = vmax.f32 %v1856, 0.0
    %v1899 = vmax.f32 %v1861, 0.0
    %v1900 = vmax.f32 %v1864, 0.0
    %v1901 = vmax.f32 %v1869, 0.0
    %v1902 = vmax.f32 %v1872, 0.0
    %v1903 = vmax.f32 %v1877, 0.0
    %v1904 = vmax.f32 %v1880, 0.0
    %v1905 = vmax.f32 %v1885, 0.0
    %v1906 = vmax.f32 %v1888, 0.0
    %v1907 = vpack.c.bf16 %v1892, %v1891
    %v1908 = vpack.c.bf16 %v1894, %v1893
    %v1909 = vpack.c.bf16 %v1896, %v1895
    %v1910 = vpack.c.bf16 %v1898, %v1897
    %v1911 = vpack.c.bf16 %v1900, %v1899
    %v1912 = vpack.c.bf16 %v1902, %v1901
    %v1913 = vpack.c.bf16 %v1904, %v1903
    %v1914 = vpack.c.bf16 %v1906, %v1905
    %v1915 = vld [vmem:[#allocation5 + $0x1c0] sm:$0xf]
    %v1916 = vld [vmem:[#allocation5 + $0x1c4] sm:$0xf]
    %v1917 = vld [vmem:[#allocation5 + $0x1c8] sm:$0xf]
    %v1918 = vld [vmem:[#allocation5 + $0x1cc] sm:$0xf]
    %v1919 = vld [vmem:[#allocation5 + $0x1d0] sm:$0xf]
    %v1920 = vld [vmem:[#allocation5 + $0x1d4] sm:$0xf]
    %v1921 = vld [vmem:[#allocation5 + $0x1d8] sm:$0xf]
    %v1922 = vld [vmem:[#allocation5 + $0x1dc] sm:$0xf]
    %v1923 = vld [vmem:[#allocation5 + $0x1e0] sm:$0xf]
    %v1924 = vld [vmem:[#allocation5 + $0x1e4] sm:$0xf]
    %v1925 = vld [vmem:[#allocation5 + $0x1e8] sm:$0xf]
    %v1926 = vld [vmem:[#allocation5 + $0x1ec] sm:$0xf]
    %v1927 = vld [vmem:[#allocation5 + $0x1f0] sm:$0xf]
    %v1928 = vld [vmem:[#allocation5 + $0x1f4] sm:$0xf]
    %v1929 = vld [vmem:[#allocation5 + $0x1f8] sm:$0xf]
    %v1930 = vld [vmem:[#allocation5 + $0x1fc] sm:$0xf]
    %v1931 = vld [vmem:[%s5 + $0x4] sm:$0x1]
    %v1932 = vlaneseq
    %v1933 = vshrl.u32 %v1932, 7
    %v1934 = vsub.s32 0, %v1933
    %v1935 = vrot.slane %v1931, %v1934
    %v1952 = vunpack.c.l.b16 %v1915
    %v1953 = vunpack.c.l.b16 %v1916
    %v1954 = vunpack.c.l.b16 %v1917
    %v1955 = vunpack.c.l.b16 %v1918
    %v1956 = vunpack.c.l.b16 %v1919
    %v1957 = vunpack.c.l.b16 %v1920
    %v1958 = vunpack.c.l.b16 %v1921
    %v1959 = vunpack.c.l.b16 %v1922
    %v1960 = vunpack.c.l.b16 %v1923
    %v1961 = vunpack.c.l.b16 %v1924
    %v1962 = vunpack.c.l.b16 %v1925
    %v1963 = vunpack.c.l.b16 %v1926
    %v1964 = vunpack.c.l.b16 %v1927
    %v1965 = vunpack.c.l.b16 %v1928
    %v1966 = vunpack.c.l.b16 %v1929
    %v1967 = vunpack.c.l.b16 %v1930
    %v1968 = vpack.c.b16 %v1953, %v1952
    %v1969 = vpack.c.b16 %v1955, %v1954
    %v1970 = vpack.c.b16 %v1957, %v1956
    %v1971 = vpack.c.b16 %v1959, %v1958
    %v1972 = vpack.c.b16 %v1961, %v1960
    %v1973 = vpack.c.b16 %v1963, %v1962
    %v1974 = vpack.c.b16 %v1965, %v1964
    %v1975 = vpack.c.b16 %v1967, %v1966
    %1984 = vmatprep.subr.bf16.mxu0 0
    %1985 = vmatpush1.bf16.msra.mxu0 %v1968
    %1986 = vmatprep.subr.bf16.mxu0 0
    %1987 = vmatpush1.bf16.msra.mxu0 %v1969
    %1988 = vmatprep.subr.bf16.mxu0 0
    %1989 = vmatpush1.bf16.msra.mxu0 %v1970
    %1990 = vmatprep.subr.bf16.mxu0 0
    %1991 = vmatpush1.bf16.msra.mxu0 %v1971
    %1992 = vmatprep.subr.bf16.mxu0 0
    %1993 = vmatpush1.bf16.msra.mxu0 %v1972
    %1994 = vmatprep.subr.bf16.mxu0 0
    %1995 = vmatpush1.bf16.msra.mxu0 %v1973
    %1996 = vmatprep.subr.bf16.mxu0 0
    %1997 = vmatpush1.bf16.msra.mxu0 %v1974
    %1998 = vmatprep.subr.bf16.mxu0 0
    %1999 = vmatpush1.bf16.msra.mxu0 %v1975
    %2000 = vmatprep.subr.bf16.mxu0 0
    %2001 = vmatpush1.bf16.msra.mxu0 0
    %2002 = vmatprep.subr.bf16.mxu0 0
    %2003 = vmatpush1.bf16.msra.mxu0 0
    %2004 = vmatprep.subr.bf16.mxu0 0
    %2005 = vmatpush1.bf16.msra.mxu0 0
    %2006 = vmatprep.subr.bf16.mxu0 0
    %2007 = vmatpush1.bf16.msra.mxu0 0
    %2008 = vmatprep.subr.bf16.mxu0 0
    %2009 = vmatpush1.bf16.msra.mxu0 0
    %2010 = vmatprep.subr.bf16.mxu0 0
    %2011 = vmatpush1.bf16.msra.mxu0 0
    %2012 = vmatprep.subr.bf16.mxu0 0
    %2013 = vmatpush1.bf16.msra.mxu0 0
    %2014 = vmatprep.subr.bf16.mxu0 0
    %2015 = vmatpush1.bf16.msra.mxu0 0
    %2016 = vmatprep.mubr.bf16.mxu0 0
    %2017 = vmatmul.mubr.bf16.gmra.mrb[0].mxu0 %v1907
    %v2018 = vpop.f32.mrb[0].mxu0
    %v2019 = vadd.f32 %v1935, %v2018
    %v2020 = vpop.f32.mrb[0].mxu0
    %v2021 = vpop.f32.mrb[0].mxu0
    %v2022 = vadd.f32 %v1935, %v2021
    %v2023 = vpop.f32.mrb[0].mxu0
    %2024 = vmatprep.mubr.bf16.mxu0 0
    %2025 = vmatmul.mubr.bf16.gmra.mrb[0].mxu0 %v1908
    %v2026 = vpop.f32.mrb[0].mxu0
    %v2027 = vadd.f32 %v1935, %v2026
    %v2028 = vpop.f32.mrb[0].mxu0
    %v2029 = vpop.f32.mrb[0].mxu0
    %v2030 = vadd.f32 %v1935, %v2029
    %v2031 = vpop.f32.mrb[0].mxu0
    %2032 = vmatprep.mubr.bf16.mxu0 0
    %2033 = vmatmul.mubr.bf16.gmra.mrb[0].mxu0 %v1909
    %v2034 = vpop.f32.mrb[0].mxu0
    %v2035 = vadd.f32 %v1935, %v2034
    %v2036 = vpop.f32.mrb[0].mxu0
    %v2037 = vpop.f32.mrb[0].mxu0
    %v2038 = vadd.f32 %v1935, %v2037
    %v2039 = vpop.f32.mrb[0].mxu0
    %2040 = vmatprep.mubr.bf16.mxu0 0
    %2041 = vmatmul.mubr.bf16.gmra.mrb[0].mxu0 %v1910
    %v2042 = vpop.f32.mrb[0].mxu0
    %v2043 = vadd.f32 %v1935, %v2042
    %v2044 = vpop.f32.mrb[0].mxu0
    %v2045 = vpop.f32.mrb[0].mxu0
    %v2046 = vadd.f32 %v1935, %v2045
    %v2047 = vpop.f32.mrb[0].mxu0
    %2048 = vmatprep.mubr.bf16.mxu0 0
    %2049 = vmatmul.mubr.bf16.gmra.mrb[0].mxu0 %v1911
    %v2050 = vpop.f32.mrb[0].mxu0
    %v2051 = vadd.f32 %v1935, %v2050
    %v2052 = vpop.f32.mrb[0].mxu0
    %v2053 = vpop.f32.mrb[0].mxu0
    %v2054 = vadd.f32 %v1935, %v2053
    %v2055 = vpop.f32.mrb[0].mxu0
    %2056 = vmatprep.mubr.bf16.mxu0 0
    %2057 = vmatmul.mubr.bf16.gmra.mrb[0].mxu0 %v1912
    %v2058 = vpop.f32.mrb[0].mxu0
    %v2059 = vadd.f32 %v1935, %v2058
    %v2060 = vpop.f32.mrb[0].mxu0
    %v2061 = vpop.f32.mrb[0].mxu0
    %v2062 = vadd.f32 %v1935, %v2061
    %v2063 = vpop.f32.mrb[0].mxu0
    %2064 = vmatprep.mubr.bf16.mxu0 0
    %2065 = vmatmul.mubr.bf16.gmra.mrb[0].mxu0 %v1913
    %v2066 = vpop.f32.mrb[0].mxu0
    %v2067 = vadd.f32 %v1935, %v2066
    %v2068 = vpop.f32.mrb[0].mxu0
    %v2069 = vpop.f32.mrb[0].mxu0
    %v2070 = vadd.f32 %v1935, %v2069
    %v2071 = vpop.f32.mrb[0].mxu0
    %2072 = vmatprep.mubr.bf16.mxu0 0
    %2073 = vmatmul.mubr.bf16.gmra.mrb[0].mxu0 %v1914
    %v2074 = vpop.f32.mrb[0].mxu0
    %v2075 = vadd.f32 %v1935, %v2074
    %v2076 = vpop.f32.mrb[0].mxu0
    %v2077 = vpop.f32.mrb[0].mxu0
    %v2078 = vadd.f32 %v1935, %v2077
    %v2079 = vpop.f32.mrb[0].mxu0
    %2080 = vdwg.mxu0
    %2081 = vst [vmem:[#allocation7] sm:$0xff] %v2019
    %2082 = vst [vmem:[#allocation7 + $0x8] sm:$0xff] %v2022
    %2083 = vst [vmem:[#allocation7 + $0x10] sm:$0xff] %v2027
    %2084 = vst [vmem:[#allocation7 + $0x18] sm:$0xff] %v2030
    %2085 = vst [vmem:[#allocation7 + $0x20] sm:$0xff] %v2035
    %2086 = vst [vmem:[#allocation7 + $0x28] sm:$0xff] %v2038
    %2087 = vst [vmem:[#allocation7 + $0x30] sm:$0xff] %v2043
    %2088 = vst [vmem:[#allocation7 + $0x38] sm:$0xff] %v2046
    %2089 = vst [vmem:[#allocation7 + $0x40] sm:$0xff] %v2051
    %2090 = vst [vmem:[#allocation7 + $0x48] sm:$0xff] %v2054
    %2091 = vst [vmem:[#allocation7 + $0x50] sm:$0xff] %v2059
    %2092 = vst [vmem:[#allocation7 + $0x58] sm:$0xff] %v2062
    %2093 = vst [vmem:[#allocation7 + $0x60] sm:$0xff] %v2067
    %2094 = vst [vmem:[#allocation7 + $0x68] sm:$0xff] %v2070
    %2095 = vst [vmem:[#allocation7 + $0x70] sm:$0xff] %v2075
    %2096 = vst [vmem:[#allocation7 + $0x78] sm:$0xff] %v2078
    // Predicated region
    $region34: #{gcn_forward_packed.1} parent=1 // pred_check
      _
    $region35: #{gcn_forward_packed.1} parent=1 // pred_check_branch
      %2098 = sbr.rel (0) target = $region37
    $region36: #{gcn_forward_packed.1} parent=1 // pred_region
      %s2100 = ssub.s32 2048, 2048
      %2101 = vsyncadd [#allocation4], %s2100
      %s2102 = sshll.u32 [#allocation7], 4
      %s2103 = int_to_ptr.vmem [resolvable:$true] %s2102
      %2108 = dma.vmem_to_hbm [thread:$0]  %s2103, 2048, %s6, [#allocation4], 128, 128, 8
    $region37: #{gcn_forward_packed.1} parent=1 // pred_fallthru
      _
    // Predicated region
    $region38: #{gcn_forward_packed.1} parent=1 // pred_check
      _
    $region39: #{gcn_forward_packed.1} parent=1 // pred_check_branch
      %2110 = sbr.rel (0) target = $region41
    $region40: #{gcn_forward_packed.1} parent=1 // pred_region
      %2111 = dma.done [#allocation4], 2048
    $region41: #{gcn_forward_packed.1} parent=1 // pred_fallthru
      _
    %2112 = vsyncpa [#allocation3], 1
    %2113 = vsyncpa [#allocation6], 1
    %2114 = vsyncpa [#allocation4], 1

</llo_original>
